<compile_context>
chip_gen: v7x
topology: tpu7x:2x2x1
jax: 0.10.0
libtpu: 0.0.40
codegen_flags: <defaults>
</compile_context>

<pallas_src>
import functools

import jax
import jax.numpy as jnp
from jax.experimental import pallas as pl
from jax.experimental.pallas import tpu as pltpu

HIDDEN = 128  # fc1/fc2 width from the module definition


def _round_up(x, m):
    return ((x + m - 1) // m) * m


# ----------------------------- Pallas kernel ------------------------------- #
def _mlp_kernel(state_ref, obs_ref, act_ref, last_ref, mask_ref,
                w1s_ref, w1o_ref, w1a_ref, w1l_ref, b1a_ref,
                w2_ref, b2_ref, w3_ref, b3_ref, o_ref):
    f32 = jnp.float32
    cdt = w2_ref.dtype  # bf16 compute dtype for MXU operands

    # Current actions of this agent's team with the agent's own action zeroed
    # out (mask is 0/1 so the bf16 multiply is exact).
    masked = act_ref[...] * mask_ref[...].astype(act_ref.dtype)      # (tb, A_pad)

    # fc1 as a sum of per-feature-group matmuls.  The per-agent bias already
    # contains b1 + w1[agent_id_onehot] (the agent-id one-hot contribution).
    h1 = (jnp.dot(state_ref[...], w1s_ref[...], preferred_element_type=f32)
          + jnp.dot(obs_ref[...], w1o_ref[...], preferred_element_type=f32)
          + jnp.dot(masked, w1a_ref[...], preferred_element_type=f32)
          + jnp.dot(last_ref[...], w1l_ref[...], preferred_element_type=f32)
          + b1a_ref[...])
    h1 = jnp.maximum(h1, 0.0).astype(cdt)

    h2 = jnp.dot(h1, w2_ref[...], preferred_element_type=f32) + b2_ref[...]
    h2 = jnp.maximum(h2, 0.0).astype(cdt)

    o_ref[...] = (jnp.dot(h2, w3_ref[...], preferred_element_type=f32)
                  + b3_ref[...]).astype(o_ref.dtype)


def coma_critic_mlp(state_p, obs_p, act_p, last_p, mask_p,
                    w1s, w1o, w1a, w1l, b1a, w2, b2, w3, b3, *, tb):
    """All operands pre-padded / lane-aligned.  Returns (BT_pad, na*N_pad) f32."""
    BT_pad, S_pad = state_p.shape
    na = mask_p.shape[0]
    O_pad = obs_p.shape[1] // na
    A_pad = act_p.shape[1]
    N_pad = w3.shape[1]
    assert BT_pad % tb == 0 and tb % 16 == 0
    grid = (BT_pad // tb, na)   # agent axis innermost -> shared blocks reused

    flops = 2 * BT_pad * na * ((S_pad + O_pad + 2 * A_pad) * HIDDEN
                               + HIDDEN * HIDDEN + HIDDEN * N_pad)
    bytes_accessed = (
        (state_p.size + obs_p.size + act_p.size + last_p.size) * 2    # bf16 streams
        + (w1s.size + w1o.size + w1a.size + w1l.size + w2.size + w3.size) * 2
        + (mask_p.size + b1a.size + b2.size + b3.size) * 4
        + BT_pad * na * N_pad * 4)                                    # f32 output

    return pl.pallas_call(
        _mlp_kernel,
        out_shape=jax.ShapeDtypeStruct((BT_pad, na * N_pad), jnp.float32),
        grid_spec=pltpu.PrefetchScalarGridSpec(
            num_scalar_prefetch=0,
            grid=grid,
            in_specs=[
                pl.BlockSpec((tb, S_pad), lambda i, a: (i, 0)),          # state
                pl.BlockSpec((tb, O_pad), lambda i, a: (i, a)),          # per-agent obs
                pl.BlockSpec((tb, A_pad), lambda i, a: (i, 0)),          # team actions
                pl.BlockSpec((tb, A_pad), lambda i, a: (i, 0)),          # last team actions
                pl.BlockSpec((None, 1, A_pad), lambda i, a: (a, 0, 0)),  # own-action mask
                pl.BlockSpec((S_pad, HIDDEN), lambda i, a: (0, 0)),      # w1 (state rows)
                pl.BlockSpec((O_pad, HIDDEN), lambda i, a: (0, 0)),      # w1 (obs rows)
                pl.BlockSpec((A_pad, HIDDEN), lambda i, a: (0, 0)),      # w1 (actions rows)
                pl.BlockSpec((A_pad, HIDDEN), lambda i, a: (0, 0)),      # w1 (last-action rows)
                pl.BlockSpec((None, 1, HIDDEN), lambda i, a: (a, 0, 0)), # b1 + w1[agent_id]
                pl.BlockSpec((HIDDEN, HIDDEN), lambda i, a: (0, 0)),     # w2
                pl.BlockSpec((1, HIDDEN), lambda i, a: (0, 0)),          # b2
                pl.BlockSpec((HIDDEN, N_pad), lambda i, a: (0, 0)),      # w3
                pl.BlockSpec((1, N_pad), lambda i, a: (0, 0)),           # b3
            ],
            out_specs=pl.BlockSpec((tb, N_pad), lambda i, a: (i, a)),
        ),
        compiler_params=pltpu.CompilerParams(
            dimension_semantics=("parallel", "arbitrary")),
        cost_estimate=pl.CostEstimate(flops=int(flops), transcendentals=0,
                                      bytes_accessed=int(bytes_accessed)),
    )(state_p, obs_p, act_p, last_p, mask_p,
      w1s, w1o, w1a, w1l, b1a, w2, b2, w3, b3)


# ------------------------------ full forward -------------------------------- #
def coma_critic_forward(params, state, obs_team, actions_onehot, *, team,
                        n_agents_team1, n_agents_team2, n_actions, tm=512):
    bs, max_t, state_dim = state.shape
    if team == 1:
        na = n_agents_team1
        sl = slice(0, n_agents_team1)
    else:
        na = n_agents_team2
        sl = slice(n_agents_team1, n_agents_team1 + n_agents_team2)
    obs_dim = obs_team.shape[-1]
    A = na * n_actions
    BT = bs * max_t

    S_pad = _round_up(state_dim, 128)
    O_pad = _round_up(obs_dim, 128)
    A_pad = _round_up(A, 128)
    N_pad = _round_up(n_actions, 128)
    tb = min(_round_up(tm, 16), _round_up(BT, 16))   # bf16 -> sublane multiple of 16
    BT_pad = _round_up(BT, tb)

    cdt = jnp.bfloat16

    # --- un-broadcast activation streams (never replicated per agent) ------ #
    state2 = state.reshape(BT, state_dim)
    acts_team = actions_onehot[:, :, sl].reshape(BT, A)
    last_team = jnp.concatenate(
        [jnp.zeros_like(actions_onehot[:, 0:1, sl]),
         actions_onehot[:, :-1, sl]], axis=1).reshape(BT, A)          # t=None branch
    obs3 = obs_team.reshape(BT, na, obs_dim)

    def pad_cast2(x, rows, cols):
        return jnp.pad(x, ((0, rows - x.shape[0]),
                           (0, cols - x.shape[1]))).astype(cdt)

    state_p = pad_cast2(state2, BT_pad, S_pad)
    act_p = pad_cast2(acts_team, BT_pad, A_pad)
    last_p = pad_cast2(last_team, BT_pad, A_pad)
    obs_p = jnp.pad(obs3, ((0, BT_pad - BT), (0, 0),
                           (0, O_pad - obs_dim))).astype(cdt)
    obs_p = obs_p.reshape(BT_pad, na * O_pad)

    # per-agent mask: zero out the agent's own action block
    agent_mask = 1.0 - jnp.eye(na, dtype=jnp.float32)
    agent_mask = jnp.repeat(agent_mask.reshape(-1, 1), n_actions,
                            axis=1).reshape(na, A)
    mask_p = jnp.pad(agent_mask, ((0, 0), (0, A_pad - A))).reshape(na, 1, A_pad)

    # --- fc1 weight split by feature group (state|obs|acts|last|agent_id) -- #
    w1 = params["w1"]
    o = 0
    w1_s = w1[o:o + state_dim]; o += state_dim
    w1_o = w1[o:o + obs_dim]; o += obs_dim
    w1_a = w1[o:o + A]; o += A
    w1_l = w1[o:o + A]; o += A
    w1_id = w1[o:o + na]

    w1s_p = jnp.pad(w1_s, ((0, S_pad - state_dim), (0, 0))).astype(cdt)
    w1o_p = jnp.pad(w1_o, ((0, O_pad - obs_dim), (0, 0))).astype(cdt)
    w1a_p = jnp.pad(w1_a, ((0, A_pad - A), (0, 0))).astype(cdt)
    w1l_p = jnp.pad(w1_l, ((0, A_pad - A), (0, 0))).astype(cdt)
    # agent-id one-hot contribution folded into a per-agent fc1 bias (f32)
    b1a = (params["b1"][None, :] + w1_id).reshape(na, 1, HIDDEN).astype(jnp.float32)
    w2_p = params["w2"].astype(cdt)
    b2_p = params["b2"].reshape(1, HIDDEN).astype(jnp.float32)
    w3_p = jnp.pad(params["w3"], ((0, 0), (0, N_pad - n_actions))).astype(cdt)
    b3_p = jnp.pad(params["b3"].reshape(1, -1),
                   ((0, 0), (0, N_pad - n_actions))).astype(jnp.float32)

    q_pad = coma_critic_mlp(state_p, obs_p, act_p, last_p, mask_p,
                            w1s_p, w1o_p, w1a_p, w1l_p, b1a,
                            w2_p, b2_p, w3_p, b3_p, tb=tb)
    q = q_pad.reshape(BT_pad, na, N_pad)[:BT, :, :n_actions]
    return q.reshape(bs, max_t, na, n_actions)


# --------------------- reference input construction ------------------------ #
def build_inputs(state, obs_team, actions_onehot, *, team, n_agents_team1,
                 n_agents_team2, n_actions):
    """Plain-JAX re-implementation of COMACriticMulti._build_inputs (t=None)."""
    bs, max_t, state_dim = state.shape
    if team == 1:
        n_agents = n_agents_team1
        sl = slice(0, n_agents_team1)
    else:
        n_agents = n_agents_team2
        sl = slice(n_agents_team1, n_agents_team1 + n_agents_team2)

    pieces = []
    pieces.append(jnp.broadcast_to(state[:, :, None, :],
                                   (bs, max_t, n_agents, state_dim)))
    pieces.append(obs_team)
    acts = actions_onehot[:, :, sl].reshape(bs, max_t, 1, n_agents * n_actions)
    acts = jnp.broadcast_to(acts, (bs, max_t, n_agents, n_agents * n_actions))
    agent_mask = 1.0 - jnp.eye(n_agents, dtype=jnp.float32)
    agent_mask = jnp.repeat(agent_mask.reshape(-1, 1), n_actions,
                            axis=1).reshape(n_agents, n_agents * n_actions)
    pieces.append(acts * agent_mask[None, None])
    last = jnp.concatenate(
        [jnp.zeros_like(actions_onehot[:, 0:1, sl]), actions_onehot[:, :-1, sl]],
        axis=1)
    last = last.reshape(bs, max_t, 1, n_agents * n_actions)
    pieces.append(jnp.broadcast_to(last,
                                   (bs, max_t, n_agents, n_agents * n_actions)))
    pieces.append(jnp.broadcast_to(jnp.eye(n_agents, dtype=jnp.float32)[None, None],
                                   (bs, max_t, n_agents, n_agents)))
    return jnp.concatenate([p.reshape(bs, max_t, n_agents, -1) for p in pieces],
                           axis=-1)


# ----------------------------- parameter init ------------------------------- #
def init_params(key, d_in, n_actions):
    """Deterministic PyTorch-Linear-style uniform init."""
    ks = jax.random.split(key, 6)

    def lin(kw, kb, fan_in, fan_out):
        bound = 1.0 / jnp.sqrt(fan_in)
        w = jax.random.uniform(kw, (fan_in, fan_out), jnp.float32, -bound, bound)
        b = jax.random.uniform(kb, (fan_out,), jnp.float32, -bound, bound)
        return w, b

    w1, b1 = lin(ks[0], ks[1], d_in, HIDDEN)
    w2, b2 = lin(ks[2], ks[3], HIDDEN, HIDDEN)
    w3, b3 = lin(ks[4], ks[5], HIDDEN, n_actions)
    return dict(w1=w1, b1=b1, w2=w2, b2=b2, w3=w3, b3=b3)


if __name__ == "__main__":
    # small, module-consistent config
    bs, max_t = 2, 8
    state_dim, obs_dim = 16, 12
    n_agents_team1, n_agents_team2 = 3, 2
    n_actions = 5
    team = 1
    n_agents = n_agents_team1
    n_agents_total = n_agents_team1 + n_agents_team2

    # input_shape = state + obs + n_actions*n_agents*2 + n_agents
    d_in = state_dim + obs_dim + n_actions * n_agents * 2 + n_agents

    key = jax.random.PRNGKey(0)
    k_state, k_obs, k_act, k_params = jax.random.split(key, 4)

    state = jax.random.normal(k_state, (bs, max_t, state_dim), jnp.float32)
    obs_team_1 = jax.random.normal(k_obs, (bs, max_t, n_agents, obs_dim),
                                   jnp.float32)
    action_ids = jax.random.randint(k_act, (bs, max_t, n_agents_total), 0,
                                    n_actions)
    actions_onehot = jax.nn.one_hot(action_ids, n_actions, dtype=jnp.float32)

    params = init_params(k_params, d_in, n_actions)

    fwd = jax.jit(functools.partial(
        coma_critic_forward, team=team, n_agents_team1=n_agents_team1,
        n_agents_team2=n_agents_team2, n_actions=n_actions))
    q = fwd(params, state, obs_team_1, actions_onehot)
    jax.block_until_ready(q)
    assert q.shape == (bs, max_t, n_agents, n_actions), q.shape

    # reference check in plain JAX (f32 end-to-end); kernel uses bf16 operand
    # streams with f32 accumulation, so the tolerance is loosened accordingly.
    inputs_ref = build_inputs(state, obs_team_1, actions_onehot, team=team,
                              n_agents_team1=n_agents_team1,
                              n_agents_team2=n_agents_team2,
                              n_actions=n_actions)
    h = jax.nn.relu(inputs_ref @ params["w1"] + params["b1"])
    h = jax.nn.relu(h @ params["w2"] + params["b2"])
    q_ref = h @ params["w3"] + params["b3"]
    assert jnp.allclose(q, q_ref, atol=5e-2, rtol=5e-2), \
        float(jnp.max(jnp.abs(q - q_ref)))

    print("KERNEL_OK")
</pallas_src>

<mosaic_0001>
module attributes {stable_mosaic.version = 11 : i64} {
  func.func @_mlp_kernel(%arg0: i32, %arg1: i32, %arg2: memref<16x128xbf16, #tpu.memory_space<vmem>>, %arg3: memref<16x128xbf16, #tpu.memory_space<vmem>>, %arg4: memref<16x128xbf16, #tpu.memory_space<vmem>>, %arg5: memref<16x128xbf16, #tpu.memory_space<vmem>>, %arg6: memref<1x1x128xf32, #tpu.memory_space<vmem>>, %arg7: memref<128x128xbf16, #tpu.memory_space<vmem>>, %arg8: memref<128x128xbf16, #tpu.memory_space<vmem>>, %arg9: memref<128x128xbf16, #tpu.memory_space<vmem>>, %arg10: memref<128x128xbf16, #tpu.memory_space<vmem>>, %arg11: memref<1x1x128xf32, #tpu.memory_space<vmem>>, %arg12: memref<128x128xbf16, #tpu.memory_space<vmem>>, %arg13: memref<1x128xf32, #tpu.memory_space<vmem>>, %arg14: memref<128x128xbf16, #tpu.memory_space<vmem>>, %arg15: memref<1x128xf32, #tpu.memory_space<vmem>>, %arg16: memref<16x128xf32, #tpu.memory_space<vmem>>) attributes {dimension_semantics = [#tpu.dimension_semantics<parallel>, #tpu.dimension_semantics<arbitrary>], iteration_bounds = array<i64: 1, 3>, scalar_prefetch = 0 : i64, scratch_operands = 0 : i64, tpu.core_type = #tpu.core_type<tc>, window_params = [{transform_indices = @transform_0, window_bounds = array<i64: 16, 128>}, {transform_indices = @transform_1, window_bounds = array<i64: 16, 128>}, {transform_indices = @transform_2, window_bounds = array<i64: 16, 128>}, {transform_indices = @transform_3, window_bounds = array<i64: 16, 128>}, {transform_indices = @transform_4, window_bounds = array<i64: 1, 1, 128>}, {pipeline_mode = #tpu.pipeline_mode<synchronous>, transform_indices = @transform_5, window_bounds = array<i64: 128, 128>}, {pipeline_mode = #tpu.pipeline_mode<synchronous>, transform_indices = @transform_6, window_bounds = array<i64: 128, 128>}, {pipeline_mode = #tpu.pipeline_mode<synchronous>, transform_indices = @transform_7, window_bounds = array<i64: 128, 128>}, {pipeline_mode = #tpu.pipeline_mode<synchronous>, transform_indices = @transform_8, window_bounds = array<i64: 128, 128>}, {transform_indices = @transform_9, window_bounds = array<i64: 1, 1, 128>}, {pipeline_mode = #tpu.pipeline_mode<synchronous>, transform_indices = @transform_10, window_bounds = array<i64: 128, 128>}, {pipeline_mode = #tpu.pipeline_mode<synchronous>, transform_indices = @transform_11, window_bounds = array<i64: 1, 128>}, {pipeline_mode = #tpu.pipeline_mode<synchronous>, transform_indices = @transform_12, window_bounds = array<i64: 128, 128>}, {pipeline_mode = #tpu.pipeline_mode<synchronous>, transform_indices = @transform_13, window_bounds = array<i64: 1, 128>}, {transform_indices = @transform_14, window_bounds = array<i64: 16, 128>}]} {
    %c0 = arith.constant 0 : index
    %c0_0 = arith.constant 0 : index
    %0 = vector.load %arg4[%c0, %c0_0] : memref<16x128xbf16, #tpu.memory_space<vmem>>, vector<16x128xbf16>
    %c0_1 = arith.constant 0 : index
    %c0_2 = arith.constant 0 : index
    %c0_3 = arith.constant 0 : index
    %1 = vector.load %arg6[%c0_1, %c0_2, %c0_3] : memref<1x1x128xf32, #tpu.memory_space<vmem>>, vector<1x1x128xf32>
    %2 = vector.shape_cast %1 : vector<1x1x128xf32> to vector<1x128xf32>
    %3 = arith.truncf %2 : vector<1x128xf32> to vector<1x128xbf16>
    %4 = vector.broadcast %3 : vector<1x128xbf16> to vector<16x128xbf16>
    %5 = arith.mulf %0, %4 : vector<16x128xbf16>
    %c0_4 = arith.constant 0 : index
    %c0_5 = arith.constant 0 : index
    %6 = vector.load %arg2[%c0_4, %c0_5] : memref<16x128xbf16, #tpu.memory_space<vmem>>, vector<16x128xbf16>
    %c0_6 = arith.constant 0 : index
    %c0_7 = arith.constant 0 : index
    %7 = vector.load %arg7[%c0_6, %c0_7] : memref<128x128xbf16, #tpu.memory_space<vmem>>, vector<128x128xbf16>
    %cst = arith.constant dense<0.000000e+00> : vector<16x128xf32>
    %8 = tpu.matmul %6, %7, %cst {dimension_numbers = #tpu.dot_dimension_numbers<[1], [0], [0], [1], [0, 0, 1, 1], [], []>} : vector<16x128xbf16>, vector<128x128xbf16>, vector<16x128xf32> -> vector<16x128xf32>
    %c0_8 = arith.constant 0 : index
    %c0_9 = arith.constant 0 : index
    %9 = vector.load %arg3[%c0_8, %c0_9] : memref<16x128xbf16, #tpu.memory_space<vmem>>, vector<16x128xbf16>
    %c0_10 = arith.constant 0 : index
    %c0_11 = arith.constant 0 : index
    %10 = vector.load %arg8[%c0_10, %c0_11] : memref<128x128xbf16, #tpu.memory_space<vmem>>, vector<128x128xbf16>
    %cst_12 = arith.constant dense<0.000000e+00> : vector<16x128xf32>
    %11 = tpu.matmul %9, %10, %cst_12 {dimension_numbers = #tpu.dot_dimension_numbers<[1], [0], [0], [1], [0, 0, 1, 1], [], []>} : vector<16x128xbf16>, vector<128x128xbf16>, vector<16x128xf32> -> vector<16x128xf32>
    %12 = arith.addf %8, %11 : vector<16x128xf32>
    %c0_13 = arith.constant 0 : index
    %c0_14 = arith.constant 0 : index
    %13 = vector.load %arg9[%c0_13, %c0_14] : memref<128x128xbf16, #tpu.memory_space<vmem>>, vector<128x128xbf16>
    %cst_15 = arith.constant dense<0.000000e+00> : vector<16x128xf32>
    %14 = tpu.matmul %5, %13, %cst_15 {dimension_numbers = #tpu.dot_dimension_numbers<[1], [0], [0], [1], [0, 0, 1, 1], [], []>} : vector<16x128xbf16>, vector<128x128xbf16>, vector<16x128xf32> -> vector<16x128xf32>
    %15 = arith.addf %12, %14 : vector<16x128xf32>
    %c0_16 = arith.constant 0 : index
    %c0_17 = arith.constant 0 : index
    %16 = vector.load %arg5[%c0_16, %c0_17] : memref<16x128xbf16, #tpu.memory_space<vmem>>, vector<16x128xbf16>
    %c0_18 = arith.constant 0 : index
    %c0_19 = arith.constant 0 : index
    %17 = vector.load %arg10[%c0_18, %c0_19] : memref<128x128xbf16, #tpu.memory_space<vmem>>, vector<128x128xbf16>
    %cst_20 = arith.constant dense<0.000000e+00> : vector<16x128xf32>
    %18 = tpu.matmul %16, %17, %cst_20 {dimension_numbers = #tpu.dot_dimension_numbers<[1], [0], [0], [1], [0, 0, 1, 1], [], []>} : vector<16x128xbf16>, vector<128x128xbf16>, vector<16x128xf32> -> vector<16x128xf32>
    %19 = arith.addf %15, %18 : vector<16x128xf32>
    %c0_21 = arith.constant 0 : index
    %c0_22 = arith.constant 0 : index
    %c0_23 = arith.constant 0 : index
    %20 = vector.load %arg11[%c0_21, %c0_22, %c0_23] : memref<1x1x128xf32, #tpu.memory_space<vmem>>, vector<1x1x128xf32>
    %21 = vector.shape_cast %20 : vector<1x1x128xf32> to vector<1x128xf32>
    %22 = vector.broadcast %21 : vector<1x128xf32> to vector<16x128xf32>
    %23 = arith.addf %19, %22 : vector<16x128xf32>
    %cst_24 = arith.constant 0.000000e+00 : f32
    %24 = vector.broadcast %cst_24 : f32 to vector<16x128xf32>
    %25 = arith.maximumf %23, %24 : vector<16x128xf32>
    %26 = arith.truncf %25 : vector<16x128xf32> to vector<16x128xbf16>
    %c0_25 = arith.constant 0 : index
    %c0_26 = arith.constant 0 : index
    %27 = vector.load %arg12[%c0_25, %c0_26] : memref<128x128xbf16, #tpu.memory_space<vmem>>, vector<128x128xbf16>
    %cst_27 = arith.constant dense<0.000000e+00> : vector<16x128xf32>
    %28 = tpu.matmul %26, %27, %cst_27 {dimension_numbers = #tpu.dot_dimension_numbers<[1], [0], [0], [1], [0, 0, 1, 1], [], []>} : vector<16x128xbf16>, vector<128x128xbf16>, vector<16x128xf32> -> vector<16x128xf32>
    %c0_28 = arith.constant 0 : index
    %c0_29 = arith.constant 0 : index
    %29 = vector.load %arg13[%c0_28, %c0_29] : memref<1x128xf32, #tpu.memory_space<vmem>>, vector<1x128xf32>
    %30 = vector.broadcast %29 : vector<1x128xf32> to vector<16x128xf32>
    %31 = arith.addf %28, %30 : vector<16x128xf32>
    %cst_30 = arith.constant 0.000000e+00 : f32
    %32 = vector.broadcast %cst_30 : f32 to vector<16x128xf32>
    %33 = arith.maximumf %31, %32 : vector<16x128xf32>
    %34 = arith.truncf %33 : vector<16x128xf32> to vector<16x128xbf16>
    %c0_31 = arith.constant 0 : index
    %c0_32 = arith.constant 0 : index
    %35 = vector.load %arg14[%c0_31, %c0_32] : memref<128x128xbf16, #tpu.memory_space<vmem>>, vector<128x128xbf16>
    %cst_33 = arith.constant dense<0.000000e+00> : vector<16x128xf32>
    %36 = tpu.matmul %34, %35, %cst_33 {dimension_numbers = #tpu.dot_dimension_numbers<[1], [0], [0], [1], [0, 0, 1, 1], [], []>} : vector<16x128xbf16>, vector<128x128xbf16>, vector<16x128xf32> -> vector<16x128xf32>
    %c0_34 = arith.constant 0 : index
    %c0_35 = arith.constant 0 : index
    %37 = vector.load %arg15[%c0_34, %c0_35] : memref<1x128xf32, #tpu.memory_space<vmem>>, vector<1x128xf32>
    %38 = vector.broadcast %37 : vector<1x128xf32> to vector<16x128xf32>
    %39 = arith.addf %36, %38 : vector<16x128xf32>
    %c0_36 = arith.constant 0 : index
    %c0_37 = arith.constant 0 : index
    %40 = vector.load %arg16[%c0_36, %c0_37] : memref<16x128xf32, #tpu.memory_space<vmem>>, vector<16x128xf32>
    tpu.vector_store %arg16[%c0_36, %c0_37], %39 {strides = array<i32>} : memref<16x128xf32, #tpu.memory_space<vmem>>, vector<16x128xf32>,
    return
  }
  func.func @transform_0(%arg0: i32, %arg1: i32) -> (i32, i32) {
    %c0_i32 = arith.constant 0 : i32
    %c0_i32_0 = arith.constant 0 : i32
    return %arg0, %c0_i32 : i32, i32
  }
  func.func @transform_1(%arg0: i32, %arg1: i32) -> (i32, i32) {
    %c0_i32 = arith.constant 0 : i32
    return %arg0, %arg1 : i32, i32
  }
  func.func @transform_2(%arg0: i32, %arg1: i32) -> (i32, i32) {
    %c0_i32 = arith.constant 0 : i32
    %c0_i32_0 = arith.constant 0 : i32
    return %arg0, %c0_i32 : i32, i32
  }
  func.func @transform_3(%arg0: i32, %arg1: i32) -> (i32, i32) {
    %c0_i32 = arith.constant 0 : i32
    %c0_i32_0 = arith.constant 0 : i32
    return %arg0, %c0_i32 : i32, i32
  }
  func.func @transform_4(%arg0: i32, %arg1: i32) -> (i32, i32, i32) {
    %c0_i32 = arith.constant 0 : i32
    %c0_i32_0 = arith.constant 0 : i32
    %c0_i32_1 = arith.constant 0 : i32
    return %arg1, %c0_i32, %c0_i32_0 : i32, i32, i32
  }
  func.func @transform_5(%arg0: i32, %arg1: i32) -> (i32, i32) {
    %c0_i32 = arith.constant 0 : i32
    %c0_i32_0 = arith.constant 0 : i32
    %c0_i32_1 = arith.constant 0 : i32
    return %c0_i32, %c0_i32_0 : i32, i32
  }
  func.func @transform_6(%arg0: i32, %arg1: i32) -> (i32, i32) {
    %c0_i32 = arith.constant 0 : i32
    %c0_i32_0 = arith.constant 0 : i32
    %c0_i32_1 = arith.constant 0 : i32
    return %c0_i32, %c0_i32_0 : i32, i32
  }
  func.func @transform_7(%arg0: i32, %arg1: i32) -> (i32, i32) {
    %c0_i32 = arith.constant 0 : i32
    %c0_i32_0 = arith.constant 0 : i32
    %c0_i32_1 = arith.constant 0 : i32
    return %c0_i32, %c0_i32_0 : i32, i32
  }
  func.func @transform_8(%arg0: i32, %arg1: i32) -> (i32, i32) {
    %c0_i32 = arith.constant 0 : i32
    %c0_i32_0 = arith.constant 0 : i32
    %c0_i32_1 = arith.constant 0 : i32
    return %c0_i32, %c0_i32_0 : i32, i32
  }
  func.func @transform_9(%arg0: i32, %arg1: i32) -> (i32, i32, i32) {
    %c0_i32 = arith.constant 0 : i32
    %c0_i32_0 = arith.constant 0 : i32
    %c0_i32_1 = arith.constant 0 : i32
    return %arg1, %c0_i32, %c0_i32_0 : i32, i32, i32
  }
  func.func @transform_10(%arg0: i32, %arg1: i32) -> (i32, i32) {
    %c0_i32 = arith.constant 0 : i32
    %c0_i32_0 = arith.constant 0 : i32
    %c0_i32_1 = arith.constant 0 : i32
    return %c0_i32, %c0_i32_0 : i32, i32
  }
  func.func @transform_11(%arg0: i32, %arg1: i32) -> (i32, i32) {
    %c0_i32 = arith.constant 0 : i32
    %c0_i32_0 = arith.constant 0 : i32
    %c0_i32_1 = arith.constant 0 : i32
    return %c0_i32, %c0_i32_0 : i32, i32
  }
  func.func @transform_12(%arg0: i32, %arg1: i32) -> (i32, i32) {
    %c0_i32 = arith.constant 0 : i32
    %c0_i32_0 = arith.constant 0 : i32
    %c0_i32_1 = arith.constant 0 : i32
    return %c0_i32, %c0_i32_0 : i32, i32
  }
  func.func @transform_13(%arg0: i32, %arg1: i32) -> (i32, i32) {
    %c0_i32 = arith.constant 0 : i32
    %c0_i32_0 = arith.constant 0 : i32
    %c0_i32_1 = arith.constant 0 : i32
    return %c0_i32, %c0_i32_0 : i32, i32
  }
  func.func @transform_14(%arg0: i32, %arg1: i32) -> (i32, i32) {
    %c0_i32 = arith.constant 0 : i32
    return %arg0, %arg1 : i32, i32
  }
}

</mosaic_0001>

<llo_original>
// kernel: coma_critic_forward.1
$region0: #{coma_critic_forward.1}
  #allocation0 [shape = 'u32[]', space=smem, size = 0x4, offset = 0x4, fixed_abs, tag = 'smem constant byte address 0x4 - core index']
  #allocation1 [shape = 'u32[144,128]{1,0:T(1,128)}', space=vmem, size = 0x12000, scoped, tag = 'internal scratch']
  %s0 = inlined_call_operand.vmem [shape: bf16[16,128], index: 0, kind: input, shape index: {}]
  %s1 = inlined_call_operand.vmem [shape: bf16[16,384], index: 1, kind: input, shape index: {}]
  %s2 = inlined_call_operand.vmem [shape: bf16[16,128], index: 2, kind: input, shape index: {}]
  %s3 = inlined_call_operand.vmem [shape: bf16[16,128], index: 3, kind: input, shape index: {}]
  %s4 = inlined_call_operand.vmem [shape: f32[3,1,128], index: 4, kind: input, shape index: {}]
  %s5 = inlined_call_operand.vmem [shape: bf16[128,128], index: 5, kind: input, shape index: {}]
  %s6 = inlined_call_operand.vmem [shape: bf16[128,128], index: 6, kind: input, shape index: {}]
  %s7 = inlined_call_operand.vmem [shape: bf16[128,128], index: 7, kind: input, shape index: {}]
  %s8 = inlined_call_operand.vmem [shape: bf16[128,128], index: 8, kind: input, shape index: {}]
  %s9 = inlined_call_operand.vmem [shape: f32[3,1,128], index: 9, kind: input, shape index: {}]
  %s10 = inlined_call_operand.vmem [shape: bf16[128,128], index: 10, kind: input, shape index: {}]
  %s11 = inlined_call_operand.vmem [shape: f32[1,128], index: 11, kind: input, shape index: {}]
  %s12 = inlined_call_operand.vmem [shape: bf16[128,128], index: 12, kind: input, shape index: {}]
  %s13 = inlined_call_operand.vmem [shape: f32[1,128], index: 13, kind: input, shape index: {}]
  %s14 = inlined_call_operand.vmem [shape: f32[16,384], index: 14, kind: output, shape index: {}]
  %s15 = sld [smem:[#allocation0]]
  $region164: #{coma_critic_forward.1} parent=0
    _
  %s17 = ssub.s32 1, %s15
  %s18 = scalar_select 0, %s17, %s15
  $region1: #{coma_critic_forward.1} parent=0
    #allocation2 [shape = 'u8[8192]{0}', space=vmem, size = 0x2000, scoped, tag = 'input window, operand 1']
    #allocation3 [shape = 'u8[16384]{0}', space=vmem, size = 0x4000, scoped, tag = 'output window, operand 0']
    loop: start=0, step=1, limit=5
    $region2: #{coma_critic_forward.1} parent=1 // loop_pre_header
      _
    $region3: #{coma_critic_forward.1} parent=1 // loop_header
      %s20 = sphi 0, %s24
      %p21 = scmp.ge.s32.totalorder %s20, 5
      %s27 = sphi 0, %s39
      %s28 = sphi 0, %s35
      %s29 = sphi 0, %s27
      %s30 = sphi 0, %s28
      %s31 = sphi 0, %s29
      %s32 = sphi 0, %s30
      %s42 = sphi 0, %s44
      %s45 = sphi 0, %s42
      %s46 = sphi 0, %s45
      %s62 = sphi 0, %s46
      %s70 = sphi 0, %s72
      %s73 = sphi 0, %s70
      %s74 = sphi 0, %s73
      %s90 = sphi 0, %s74
      %s96 = sphi 0, %s98
      %s99 = sphi 0, %s96
      %s100 = sphi 0, %s99
      %s116 = sphi 0, %s100
      %s122 = sphi 0, %s124
      %s125 = sphi 0, %s122
      %s126 = sphi 0, %s125
      %s142 = sphi 0, %s126
      %s148 = sphi 0, %s150
      %s151 = sphi 0, %s148
      %s152 = sphi 0, %s151
      %s168 = sphi 0, %s152
      %s172 = sphi 0, %s172
      %s174 = sphi 0, %s172
      %s175 = sphi 0, %s174
      %s189 = sphi 0, %s175
      %s193 = sphi 0, %s193
      %s195 = sphi 0, %s193
      %s196 = sphi 0, %s195
      %s210 = sphi 0, %s196
      %s214 = sphi 0, %s214
      %s216 = sphi 0, %s214
      %s217 = sphi 0, %s216
      %s231 = sphi 0, %s217
      %s235 = sphi 0, %s235
      %s237 = sphi 0, %s235
      %s238 = sphi 0, %s237
      %s252 = sphi 0, %s238
      %s258 = sphi 0, %s260
      %s261 = sphi 0, %s258
      %s262 = sphi 0, %s261
      %s278 = sphi 0, %s262
      %s282 = sphi 0, %s282
      %s284 = sphi 0, %s282
      %s285 = sphi 0, %s284
      %s299 = sphi 0, %s285
      %s303 = sphi 0, %s303
      %s305 = sphi 0, %s303
      %s306 = sphi 0, %s305
      %s320 = sphi 0, %s306
      %s324 = sphi 0, %s324
      %s326 = sphi 0, %s324
      %s327 = sphi 0, %s326
      %s341 = sphi 0, %s327
      %s345 = sphi 0, %s345
      %s347 = sphi 0, %s345
      %s348 = sphi 0, %s347
      %s362 = sphi 0, %s348
      %s370 = sphi 0, %s372
      %s373 = sphi 0, %s370
      %s374 = sphi 0, %s373
      %s390 = sphi 0, %s374
    $region4: #{coma_critic_forward.1} parent=1 // loop_header_branch
      %23 = sbr.rel (%p21) target = $region8
    $region5: #{coma_critic_forward.1} parent=1 // loop_body
      %s25 = ssub.s32 %s20, 1
      %s26 = ssub.s32 %s20, 2
      %s33 = sadd.s32 1, %s28
      %p34 = scmp.ge.s32.totalorder %s33, 3
      %s35 = scalar_select %p34, 0, %s33
      %s36 = sadd.s32 1, %s27
      %s37 = scalar_select %p34, %s36, %s27
      %p38 = scmp.ge.s32.totalorder %s37, 1
      %s39 = scalar_select %p38, 0, %s37
      %s40 = ssub.s32 %s27, %s39
      %p41 = scmp.eq.s32.totalorder %s40, 0
      %s43 = sadd.s32 %s42, 1
      %s44 = scalar_select %p41, %s42, %s43
      %p47 = pneg %p41
      %p48 = scmp.eq.s32.totalorder %s20, 2
      %p49 = por %p47, %p48
      %p50 = scmp.ne.s32.totalorder %s42, %s45
      %p51 = scmp.eq.s32.totalorder %s20, 0
      %p52 = por %p50, %p51
      %p53 = scmp.ne.s32.totalorder %s42, %s45
      %p54 = scmp.eq.s32.totalorder %s25, 2
      %p55 = por %p53, %p54
      %p56 = scmp.ne.s32.totalorder %s45, %s46
      %p57 = scmp.eq.s32.totalorder %s25, 0
      %p58 = por %p56, %p57
      %p59 = scmp.ne.s32.totalorder %s45, %s46
      %p60 = scmp.eq.s32.totalorder %s26, 2
      %p61 = por %p59, %p60
      %p63 = scmp.ne.s32.totalorder %s46, %s62
      %p64 = scmp.eq.s32.totalorder %s26, 0
      %p65 = por %p63, %p64
      %s66 = ssub.s32 %s27, %s39
      %s67 = ssub.s32 %s28, %s35
      %s68 = sor.u32 %s66, %s67
      %p69 = scmp.eq.s32.totalorder %s68, 0
      %s71 = sadd.s32 %s70, 1
      %s72 = scalar_select %p69, %s70, %s71
      %p75 = pneg %p69
      %p76 = scmp.eq.s32.totalorder %s20, 2
      %p77 = por %p75, %p76
      %p78 = scmp.ne.s32.totalorder %s70, %s73
      %p79 = scmp.eq.s32.totalorder %s20, 0
      %p80 = por %p78, %p79
      %p81 = scmp.ne.s32.totalorder %s70, %s73
      %p82 = scmp.eq.s32.totalorder %s25, 2
      %p83 = por %p81, %p82
      %p84 = scmp.ne.s32.totalorder %s73, %s74
      %p85 = scmp.eq.s32.totalorder %s25, 0
      %p86 = por %p84, %p85
      %p87 = scmp.ne.s32.totalorder %s73, %s74
      %p88 = scmp.eq.s32.totalorder %s26, 2
      %p89 = por %p87, %p88
      %p91 = scmp.ne.s32.totalorder %s74, %s90
      %p92 = scmp.eq.s32.totalorder %s26, 0
      %p93 = por %p91, %p92
      %s94 = ssub.s32 %s27, %s39
      %p95 = scmp.eq.s32.totalorder %s94, 0
      %s97 = sadd.s32 %s96, 1
      %s98 = scalar_select %p95, %s96, %s97
      %p101 = pneg %p95
      %p102 = scmp.eq.s32.totalorder %s20, 2
      %p103 = por %p101, %p102
      %p104 = scmp.ne.s32.totalorder %s96, %s99
      %p105 = scmp.eq.s32.totalorder %s20, 0
      %p106 = por %p104, %p105
      %p107 = scmp.ne.s32.totalorder %s96, %s99
      %p108 = scmp.eq.s32.totalorder %s25, 2
      %p109 = por %p107, %p108
      %p110 = scmp.ne.s32.totalorder %s99, %s100
      %p111 = scmp.eq.s32.totalorder %s25, 0
      %p112 = por %p110, %p111
      %p113 = scmp.ne.s32.totalorder %s99, %s100
      %p114 = scmp.eq.s32.totalorder %s26, 2
      %p115 = por %p113, %p114
      %p117 = scmp.ne.s32.totalorder %s100, %s116
      %p118 = scmp.eq.s32.totalorder %s26, 0
      %p119 = por %p117, %p118
      %s120 = ssub.s32 %s27, %s39
      %p121 = scmp.eq.s32.totalorder %s120, 0
      %s123 = sadd.s32 %s122, 1
      %s124 = scalar_select %p121, %s122, %s123
      %p127 = pneg %p121
      %p128 = scmp.eq.s32.totalorder %s20, 2
      %p129 = por %p127, %p128
      %p130 = scmp.ne.s32.totalorder %s122, %s125
      %p131 = scmp.eq.s32.totalorder %s20, 0
      %p132 = por %p130, %p131
      %p133 = scmp.ne.s32.totalorder %s122, %s125
      %p134 = scmp.eq.s32.totalorder %s25, 2
      %p135 = por %p133, %p134
      %p136 = scmp.ne.s32.totalorder %s125, %s126
      %p137 = scmp.eq.s32.totalorder %s25, 0
      %p138 = por %p136, %p137
      %p139 = scmp.ne.s32.totalorder %s125, %s126
      %p140 = scmp.eq.s32.totalorder %s26, 2
      %p141 = por %p139, %p140
      %p143 = scmp.ne.s32.totalorder %s126, %s142
      %p144 = scmp.eq.s32.totalorder %s26, 0
      %p145 = por %p143, %p144
      %s146 = ssub.s32 %s28, %s35
      %p147 = scmp.eq.s32.totalorder %s146, 0
      %s149 = sadd.s32 %s148, 1
      %s150 = scalar_select %p147, %s148, %s149
      %p153 = pneg %p147
      %p154 = scmp.eq.s32.totalorder %s20, 2
      %p155 = por %p153, %p154
      %p156 = scmp.ne.s32.totalorder %s148, %s151
      %p157 = scmp.eq.s32.totalorder %s20, 0
      %p158 = por %p156, %p157
      %p159 = scmp.ne.s32.totalorder %s148, %s151
      %p160 = scmp.eq.s32.totalorder %s25, 2
      %p161 = por %p159, %p160
      %p162 = scmp.ne.s32.totalorder %s151, %s152
      %p163 = scmp.eq.s32.totalorder %s25, 0
      %p164 = por %p162, %p163
      %p165 = scmp.ne.s32.totalorder %s151, %s152
      %p166 = scmp.eq.s32.totalorder %s26, 2
      %p167 = por %p165, %p166
      %p169 = scmp.ne.s32.totalorder %s152, %s168
      %p170 = scmp.eq.s32.totalorder %s26, 0
      %p171 = por %p169, %p170
      %s173 = sadd.s32 %s172, 1
      %p176 = scmp.eq.s32.totalorder %s20, 2
      %p177 = scmp.ne.s32.totalorder %s172, %s174
      %p178 = scmp.eq.s32.totalorder %s20, 0
      %p179 = por %p177, %p178
      %p180 = scmp.ne.s32.totalorder %s172, %s174
      %p181 = scmp.eq.s32.totalorder %s25, 2
      %p182 = por %p180, %p181
      %p183 = scmp.ne.s32.totalorder %s174, %s175
      %p184 = scmp.eq.s32.totalorder %s25, 0
      %p185 = por %p183, %p184
      %p186 = scmp.ne.s32.totalorder %s174, %s175
      %p187 = scmp.eq.s32.totalorder %s26, 2
      %p188 = por %p186, %p187
      %p190 = scmp.ne.s32.totalorder %s175, %s189
      %p191 = scmp.eq.s32.totalorder %s26, 0
      %p192 = por %p190, %p191
      %s194 = sadd.s32 %s193, 1
      %p197 = scmp.eq.s32.totalorder %s20, 2
      %p198 = scmp.ne.s32.totalorder %s193, %s195
      %p199 = scmp.eq.s32.totalorder %s20, 0
      %p200 = por %p198, %p199
      %p201 = scmp.ne.s32.totalorder %s193, %s195
      %p202 = scmp.eq.s32.totalorder %s25, 2
      %p203 = por %p201, %p202
      %p204 = scmp.ne.s32.totalorder %s195, %s196
      %p205 = scmp.eq.s32.totalorder %s25, 0
      %p206 = por %p204, %p205
      %p207 = scmp.ne.s32.totalorder %s195, %s196
      %p208 = scmp.eq.s32.totalorder %s26, 2
      %p209 = por %p207, %p208
      %p211 = scmp.ne.s32.totalorder %s196, %s210
      %p212 = scmp.eq.s32.totalorder %s26, 0
      %p213 = por %p211, %p212
      %s215 = sadd.s32 %s214, 1
      %p218 = scmp.eq.s32.totalorder %s20, 2
      %p219 = scmp.ne.s32.totalorder %s214, %s216
      %p220 = scmp.eq.s32.totalorder %s20, 0
      %p221 = por %p219, %p220
      %p222 = scmp.ne.s32.totalorder %s214, %s216
      %p223 = scmp.eq.s32.totalorder %s25, 2
      %p224 = por %p222, %p223
      %p225 = scmp.ne.s32.totalorder %s216, %s217
      %p226 = scmp.eq.s32.totalorder %s25, 0
      %p227 = por %p225, %p226
      %p228 = scmp.ne.s32.totalorder %s216, %s217
      %p229 = scmp.eq.s32.totalorder %s26, 2
      %p230 = por %p228, %p229
      %p232 = scmp.ne.s32.totalorder %s217, %s231
      %p233 = scmp.eq.s32.totalorder %s26, 0
      %p234 = por %p232, %p233
      %s236 = sadd.s32 %s235, 1
      %p239 = scmp.eq.s32.totalorder %s20, 2
      %p240 = scmp.ne.s32.totalorder %s235, %s237
      %p241 = scmp.eq.s32.totalorder %s20, 0
      %p242 = por %p240, %p241
      %p243 = scmp.ne.s32.totalorder %s235, %s237
      %p244 = scmp.eq.s32.totalorder %s25, 2
      %p245 = por %p243, %p244
      %p246 = scmp.ne.s32.totalorder %s237, %s238
      %p247 = scmp.eq.s32.totalorder %s25, 0
      %p248 = por %p246, %p247
      %p249 = scmp.ne.s32.totalorder %s237, %s238
      %p250 = scmp.eq.s32.totalorder %s26, 2
      %p251 = por %p249, %p250
      %p253 = scmp.ne.s32.totalorder %s238, %s252
      %p254 = scmp.eq.s32.totalorder %s26, 0
      %p255 = por %p253, %p254
      %s256 = ssub.s32 %s28, %s35
      %p257 = scmp.eq.s32.totalorder %s256, 0
      %s259 = sadd.s32 %s258, 1
      %s260 = scalar_select %p257, %s258, %s259
      %p263 = pneg %p257
      %p264 = scmp.eq.s32.totalorder %s20, 2
      %p265 = por %p263, %p264
      %p266 = scmp.ne.s32.totalorder %s258, %s261
      %p267 = scmp.eq.s32.totalorder %s20, 0
      %p268 = por %p266, %p267
      %p269 = scmp.ne.s32.totalorder %s258, %s261
      %p270 = scmp.eq.s32.totalorder %s25, 2
      %p271 = por %p269, %p270
      %p272 = scmp.ne.s32.totalorder %s261, %s262
      %p273 = scmp.eq.s32.totalorder %s25, 0
      %p274 = por %p272, %p273
      %p275 = scmp.ne.s32.totalorder %s261, %s262
      %p276 = scmp.eq.s32.totalorder %s26, 2
      %p277 = por %p275, %p276
      %p279 = scmp.ne.s32.totalorder %s262, %s278
      %p280 = scmp.eq.s32.totalorder %s26, 0
      %p281 = por %p279, %p280
      %s283 = sadd.s32 %s282, 1
      %p286 = scmp.eq.s32.totalorder %s20, 2
      %p287 = scmp.ne.s32.totalorder %s282, %s284
      %p288 = scmp.eq.s32.totalorder %s20, 0
      %p289 = por %p287, %p288
      %p290 = scmp.ne.s32.totalorder %s282, %s284
      %p291 = scmp.eq.s32.totalorder %s25, 2
      %p292 = por %p290, %p291
      %p293 = scmp.ne.s32.totalorder %s284, %s285
      %p294 = scmp.eq.s32.totalorder %s25, 0
      %p295 = por %p293, %p294
      %p296 = scmp.ne.s32.totalorder %s284, %s285
      %p297 = scmp.eq.s32.totalorder %s26, 2
      %p298 = por %p296, %p297
      %p300 = scmp.ne.s32.totalorder %s285, %s299
      %p301 = scmp.eq.s32.totalorder %s26, 0
      %p302 = por %p300, %p301
      %s304 = sadd.s32 %s303, 1
      %p307 = scmp.eq.s32.totalorder %s20, 2
      %p308 = scmp.ne.s32.totalorder %s303, %s305
      %p309 = scmp.eq.s32.totalorder %s20, 0
      %p310 = por %p308, %p309
      %p311 = scmp.ne.s32.totalorder %s303, %s305
      %p312 = scmp.eq.s32.totalorder %s25, 2
      %p313 = por %p311, %p312
      %p314 = scmp.ne.s32.totalorder %s305, %s306
      %p315 = scmp.eq.s32.totalorder %s25, 0
      %p316 = por %p314, %p315
      %p317 = scmp.ne.s32.totalorder %s305, %s306
      %p318 = scmp.eq.s32.totalorder %s26, 2
      %p319 = por %p317, %p318
      %p321 = scmp.ne.s32.totalorder %s306, %s320
      %p322 = scmp.eq.s32.totalorder %s26, 0
      %p323 = por %p321, %p322
      %s325 = sadd.s32 %s324, 1
      %p328 = scmp.eq.s32.totalorder %s20, 2
      %p329 = scmp.ne.s32.totalorder %s324, %s326
      %p330 = scmp.eq.s32.totalorder %s20, 0
      %p331 = por %p329, %p330
      %p332 = scmp.ne.s32.totalorder %s324, %s326
      %p333 = scmp.eq.s32.totalorder %s25, 2
      %p334 = por %p332, %p333
      %p335 = scmp.ne.s32.totalorder %s326, %s327
      %p336 = scmp.eq.s32.totalorder %s25, 0
      %p337 = por %p335, %p336
      %p338 = scmp.ne.s32.totalorder %s326, %s327
      %p339 = scmp.eq.s32.totalorder %s26, 2
      %p340 = por %p338, %p339
      %p342 = scmp.ne.s32.totalorder %s327, %s341
      %p343 = scmp.eq.s32.totalorder %s26, 0
      %p344 = por %p342, %p343
      %s346 = sadd.s32 %s345, 1
      %p349 = scmp.eq.s32.totalorder %s20, 2
      %p350 = scmp.ne.s32.totalorder %s345, %s347
      %p351 = scmp.eq.s32.totalorder %s20, 0
      %p352 = por %p350, %p351
      %p353 = scmp.ne.s32.totalorder %s345, %s347
      %p354 = scmp.eq.s32.totalorder %s25, 2
      %p355 = por %p353, %p354
      %p356 = scmp.ne.s32.totalorder %s347, %s348
      %p357 = scmp.eq.s32.totalorder %s25, 0
      %p358 = por %p356, %p357
      %p359 = scmp.ne.s32.totalorder %s347, %s348
      %p360 = scmp.eq.s32.totalorder %s26, 2
      %p361 = por %p359, %p360
      %p363 = scmp.ne.s32.totalorder %s348, %s362
      %p364 = scmp.eq.s32.totalorder %s26, 0
      %p365 = por %p363, %p364
      %s366 = ssub.s32 %s27, %s39
      %s367 = ssub.s32 %s28, %s35
      %s368 = sor.u32 %s366, %s367
      %p369 = scmp.eq.s32.totalorder %s368, 0
      %s371 = sadd.s32 %s370, 1
      %s372 = scalar_select %p369, %s370, %s371
      %p375 = pneg %p369
      %p376 = scmp.eq.s32.totalorder %s20, 2
      %p377 = por %p375, %p376
      %p378 = scmp.ne.s32.totalorder %s370, %s373
      %p379 = scmp.eq.s32.totalorder %s20, 0
      %p380 = por %p378, %p379
      %p381 = scmp.ne.s32.totalorder %s370, %s373
      %p382 = scmp.eq.s32.totalorder %s25, 2
      %p383 = por %p381, %p382
      %p384 = scmp.ne.s32.totalorder %s373, %s374
      %p385 = scmp.eq.s32.totalorder %s25, 0
      %p386 = por %p384, %p385
      %p387 = scmp.ne.s32.totalorder %s373, %s374
      %p388 = scmp.eq.s32.totalorder %s26, 2
      %p389 = por %p387, %p388
      %p391 = scmp.ne.s32.totalorder %s374, %s390
      %p392 = scmp.eq.s32.totalorder %s26, 0
      %p393 = por %p391, %p392
      %p394 = scmp.le.s32.totalorder 1, %s20
      %p395 = scmp.lt.s32.totalorder %s20, 4
      %p396 = pnand %p394, %p395
      %p397 = pneg %p396
      // Predicated region
      $region9: #{coma_critic_forward.1} parent=5 // pred_check
        _
      $region10: #{coma_critic_forward.1} parent=5 // pred_check_branch
        %399 = sbr.rel (%p396) target = $region12
      $region11: #{coma_critic_forward.1} parent=5 // pred_region
        %s400 = ssub.s32 %s20, 1
        // Predicated region
        $region13: #{coma_critic_forward.1} parent=11 // pred_check
          %p401 = pneg %p58
        $region14: #{coma_critic_forward.1} parent=11 // pred_check_branch
          %403 = sbr.rel (%p401) target = $region16
        $region15: #{coma_critic_forward.1} parent=11 // pred_region
          %s404 = smul.u32 2, %s29
          %p405 = scmp.lt.s32.totalorder %s404, 1
          %s406 = scalar_select %p405, %s404, 1
          %s407 = smul.addr %s406, 4
          %s408 = scalar_lea.vmem %s0, %s407
          %s409 = smul.u32 2, %s29
        $region16: #{coma_critic_forward.1} parent=11 // pred_fallthru
          _
        // Predicated region
        $region17: #{coma_critic_forward.1} parent=11 // pred_check
          %p410 = pneg %p112
        $region18: #{coma_critic_forward.1} parent=11 // pred_check_branch
          %412 = sbr.rel (%p410) target = $region20
        $region19: #{coma_critic_forward.1} parent=11 // pred_region
          %s413 = smul.u32 2, %s29
          %p414 = scmp.lt.s32.totalorder %s413, 1
          %s415 = scalar_select %p414, %s413, 1
          %s416 = smul.addr %s415, 4
          %s417 = scalar_lea.vmem %s2, %s416
          %s418 = smul.u32 2, %s29
        $region20: #{coma_critic_forward.1} parent=11 // pred_fallthru
          _
        // Predicated region
        $region21: #{coma_critic_forward.1} parent=11 // pred_check
          %p419 = pneg %p138
        $region22: #{coma_critic_forward.1} parent=11 // pred_check_branch
          %421 = sbr.rel (%p419) target = $region24
        $region23: #{coma_critic_forward.1} parent=11 // pred_region
          %s422 = smul.u32 2, %s29
          %p423 = scmp.lt.s32.totalorder %s422, 1
          %s424 = scalar_select %p423, %s422, 1
          %s425 = smul.addr %s424, 4
          %s426 = scalar_lea.vmem %s3, %s425
          %s427 = smul.u32 2, %s29
        $region24: #{coma_critic_forward.1} parent=11 // pred_fallthru
          _
        // Predicated region
        $region25: #{coma_critic_forward.1} parent=11 // pred_check
          %p428 = pneg %p185
        $region26: #{coma_critic_forward.1} parent=11 // pred_check_branch
          %430 = sbr.rel (%p428) target = $region28
        $region27: #{coma_critic_forward.1} parent=11 // pred_region
          _
        $region28: #{coma_critic_forward.1} parent=11 // pred_fallthru
          _
        // Predicated region
        $region29: #{coma_critic_forward.1} parent=11 // pred_check
          %p431 = pneg %p206
        $region30: #{coma_critic_forward.1} parent=11 // pred_check_branch
          %433 = sbr.rel (%p431) target = $region32
        $region31: #{coma_critic_forward.1} parent=11 // pred_region
          _
        $region32: #{coma_critic_forward.1} parent=11 // pred_fallthru
          _
        // Predicated region
        $region33: #{coma_critic_forward.1} parent=11 // pred_check
          %p434 = pneg %p227
        $region34: #{coma_critic_forward.1} parent=11 // pred_check_branch
          %436 = sbr.rel (%p434) target = $region36
        $region35: #{coma_critic_forward.1} parent=11 // pred_region
          _
        $region36: #{coma_critic_forward.1} parent=11 // pred_fallthru
          _
        // Predicated region
        $region37: #{coma_critic_forward.1} parent=11 // pred_check
          %p437 = pneg %p248
        $region38: #{coma_critic_forward.1} parent=11 // pred_check_branch
          %439 = sbr.rel (%p437) target = $region40
        $region39: #{coma_critic_forward.1} parent=11 // pred_region
          _
        $region40: #{coma_critic_forward.1} parent=11 // pred_fallthru
          _
        // Predicated region
        $region41: #{coma_critic_forward.1} parent=11 // pred_check
          %p440 = pneg %p295
        $region42: #{coma_critic_forward.1} parent=11 // pred_check_branch
          %442 = sbr.rel (%p440) target = $region44
        $region43: #{coma_critic_forward.1} parent=11 // pred_region
          _
        $region44: #{coma_critic_forward.1} parent=11 // pred_fallthru
          _
        // Predicated region
        $region45: #{coma_critic_forward.1} parent=11 // pred_check
          %p443 = pneg %p316
        $region46: #{coma_critic_forward.1} parent=11 // pred_check_branch
          %445 = sbr.rel (%p443) target = $region48
        $region47: #{coma_critic_forward.1} parent=11 // pred_region
          _
        $region48: #{coma_critic_forward.1} parent=11 // pred_fallthru
          _
        // Predicated region
        $region49: #{coma_critic_forward.1} parent=11 // pred_check
          %p446 = pneg %p337
        $region50: #{coma_critic_forward.1} parent=11 // pred_check_branch
          %448 = sbr.rel (%p446) target = $region52
        $region51: #{coma_critic_forward.1} parent=11 // pred_region
          _
        $region52: #{coma_critic_forward.1} parent=11 // pred_fallthru
          _
        // Predicated region
        $region53: #{coma_critic_forward.1} parent=11 // pred_check
          %p449 = pneg %p358
        $region54: #{coma_critic_forward.1} parent=11 // pred_check_branch
          %451 = sbr.rel (%p449) target = $region56
        $region55: #{coma_critic_forward.1} parent=11 // pred_region
          _
        $region56: #{coma_critic_forward.1} parent=11 // pred_fallthru
          _
      $region12: #{coma_critic_forward.1} parent=5 // pred_fallthru
        _
      %p452 = scmp.lt.s32.totalorder %s20, 3
      // Predicated region
      $region57: #{coma_critic_forward.1} parent=5 // pred_check
        %p453 = pneg %p452
      $region58: #{coma_critic_forward.1} parent=5 // pred_check_branch
        %455 = sbr.rel (%p453) target = $region60
      $region59: #{coma_critic_forward.1} parent=5 // pred_region
        // Predicated region
        $region61: #{coma_critic_forward.1} parent=59 // pred_check
          %p456 = pneg %p80
        $region62: #{coma_critic_forward.1} parent=59 // pred_check_branch
          %458 = sbr.rel (%p456) target = $region64
        $region63: #{coma_critic_forward.1} parent=59 // pred_region
          %s459 = sand.u32 %s70, 1
          %s460 = sand.u32 %s70, 1
          %s461 = smul.addr %s460, 8
          %s462 = scalar_lea.vmem [#allocation2], %s461
          %s463 = smul.u32 2, %s27
          %s464 = smul.addr %s463, 3
          %s465 = sadd.s32 %s28, %s464
          %s466 = smul.addr %s465, 4
          %s467 = scalar_lea.vmem %s1, %s466
          // Predicated region
          $region65: #{coma_critic_forward.1} parent=63 // pred_check
            _
          $region66: #{coma_critic_forward.1} parent=63 // pred_check_branch
            %469 = sbr.rel (0) target = $region68
          $region67: #{coma_critic_forward.1} parent=63 // pred_region
            // Predicated region
            $region69: #{coma_critic_forward.1} parent=67 // pred_check
              _
            $region70: #{coma_critic_forward.1} parent=67 // pred_check_branch
              %471 = sbr.rel target = $region72
            $region71: #{coma_critic_forward.1} parent=67 // pred_region
              // Predicated region
              $region84: #{coma_critic_forward.1} parent=71 // pred_check
                _
              $region85: #{coma_critic_forward.1} parent=71 // pred_check_branch
                %488 = sbr.rel (0) target = $region87
              $region86: #{coma_critic_forward.1} parent=71 // pred_region
                loop: start=0, step=1, limit=1
                $region88: #{coma_critic_forward.1} parent=86 // loop_pre_header
                  _
                $region89: #{coma_critic_forward.1} parent=86 // loop_header
                  %s490 = sphi 0, %s494
                  %p491 = scmp.ge.s32.totalorder %s490, 1
                  %s495 = sphi %s467, %s467
                  %s496 = sphi %s462, %s462
                $region90: #{coma_critic_forward.1} parent=86 // loop_header_branch
                  %493 = sbr.rel (%p491) target = $region94
                $region91: #{coma_critic_forward.1} parent=86 // loop_body
                  _
                $region92: #{coma_critic_forward.1} parent=86 // loop_footer
                  %s494 = sadd.s32 1, %s490
                $region93: #{coma_critic_forward.1} parent=86 // loop_footer_branch
                  %489 = sbr.rel target = $region89
                $region94: #{coma_critic_forward.1} parent=86 // loop_exit
                  _
                loop: start=0, step=1, limit=1
                $region95: #{coma_critic_forward.1} parent=86 // loop_pre_header
                  _
                $region96: #{coma_critic_forward.1} parent=86 // loop_header
                  %s499 = sphi 0, %s503
                  %p500 = scmp.ge.s32.totalorder %s499, 1
                  %s504 = sphi %s467, %s467
                  %s505 = sphi %s462, %s462
                $region97: #{coma_critic_forward.1} parent=86 // loop_header_branch
                  %502 = sbr.rel (%p500) target = $region101
                $region98: #{coma_critic_forward.1} parent=86 // loop_body
                  %v506 = vld [vmem:[%s504] sm:$0xf]
                  %507 = vst [vmem:[%s505] sm:$0xf] %v506
                  %v508 = vld [vmem:[%s504 + $0xc] sm:$0xf]
                  %509 = vst [vmem:[%s505 + $0x4] sm:$0xf] %v508
                $region99: #{coma_critic_forward.1} parent=86 // loop_footer
                  %s503 = sadd.s32 1, %s499
                $region100: #{coma_critic_forward.1} parent=86 // loop_footer_branch
                  %498 = sbr.rel target = $region96
                $region101: #{coma_critic_forward.1} parent=86 // loop_exit
                  _
              $region87: #{coma_critic_forward.1} parent=71 // pred_fallthru
                _
            $region72: #{coma_critic_forward.1} parent=67 // pred_fallthru
              _
            // Predicated region
            $region73: #{coma_critic_forward.1} parent=67 // pred_check
              _
            $region74: #{coma_critic_forward.1} parent=67 // pred_check_branch
              %473 = sbr.rel (0) target = $region76
            $region75: #{coma_critic_forward.1} parent=67 // pred_region
              loop: start=0, step=1, limit=1
              $region77: #{coma_critic_forward.1} parent=75 // loop_pre_header
                _
              $region78: #{coma_critic_forward.1} parent=75 // loop_header
                %s476 = sphi 0, %s480
                %p477 = scmp.ge.s32.totalorder %s476, 1
                %s481 = sphi %s467, %s467
                %s482 = sphi %s462, %s462
              $region79: #{coma_critic_forward.1} parent=75 // loop_header_branch
                %479 = sbr.rel (%p477) target = $region83
              $region80: #{coma_critic_forward.1} parent=75 // loop_body
                %v483 = vld [vmem:[%s481] sm:$0xf]
                %484 = vst [vmem:[%s482] sm:$0xf] %v483
                %v485 = vld [vmem:[%s481 + $0xc] sm:$0xf]
                %486 = vst [vmem:[%s482 + $0x4] sm:$0xf] %v485
              $region81: #{coma_critic_forward.1} parent=75 // loop_footer
                %s480 = sadd.s32 1, %s476
              $region82: #{coma_critic_forward.1} parent=75 // loop_footer_branch
                %475 = sbr.rel target = $region78
              $region83: #{coma_critic_forward.1} parent=75 // loop_exit
                _
            $region76: #{coma_critic_forward.1} parent=67 // pred_fallthru
              _
          $region68: #{coma_critic_forward.1} parent=63 // pred_fallthru
            _
          %510 = vnop
        $region64: #{coma_critic_forward.1} parent=59 // pred_fallthru
          _
        // Predicated region
        $region102: #{coma_critic_forward.1} parent=59 // pred_check
          %p511 = pneg %p158
        $region103: #{coma_critic_forward.1} parent=59 // pred_check_branch
          %513 = sbr.rel (%p511) target = $region105
        $region104: #{coma_critic_forward.1} parent=59 // pred_region
          %p514 = scmp.lt.s32.totalorder %s28, 2
          %s515 = scalar_select %p514, %s28, 2
          %s516 = scalar_lea.vmem %s4, %s515
        $region105: #{coma_critic_forward.1} parent=59 // pred_fallthru
          _
        // Predicated region
        $region106: #{coma_critic_forward.1} parent=59 // pred_check
          %p517 = pneg %p268
        $region107: #{coma_critic_forward.1} parent=59 // pred_check_branch
          %519 = sbr.rel (%p517) target = $region109
        $region108: #{coma_critic_forward.1} parent=59 // pred_region
          %p520 = scmp.lt.s32.totalorder %s28, 2
          %s521 = scalar_select %p520, %s28, 2
          %s522 = scalar_lea.vmem %s9, %s521
        $region109: #{coma_critic_forward.1} parent=59 // pred_fallthru
          _
      $region60: #{coma_critic_forward.1} parent=5 // pred_fallthru
        _
      %p523 = scmp.le.s32.totalorder 1, %s20
      %p524 = scmp.lt.s32.totalorder %s20, 4
      %p525 = pnand %p523, %p524
      %p526 = pneg %p525
      // Predicated region
      $region110: #{coma_critic_forward.1} parent=5 // pred_check
        _
      $region111: #{coma_critic_forward.1} parent=5 // pred_check_branch
        %528 = sbr.rel (%p525) target = $region113
      $region112: #{coma_critic_forward.1} parent=5 // pred_region
        %s529 = ssub.s32 %s20, 1
        %s530 = sand.u32 %s73, 1
        %s531 = sand.u32 %s73, 1
        %s532 = smul.addr %s531, 8
        %s533 = scalar_lea.vmem [#allocation2], %s532
        // Predicated region
        $region114: #{coma_critic_forward.1} parent=112 // pred_check
          %p534 = pneg %p86
        $region115: #{coma_critic_forward.1} parent=112 // pred_check_branch
          %536 = sbr.rel (%p534) target = $region117
        $region116: #{coma_critic_forward.1} parent=112 // pred_region
          _
        $region117: #{coma_critic_forward.1} parent=112 // pred_fallthru
          _
        %s537 = smul.u32 2, %s29
        %p538 = scmp.lt.s32.totalorder %s537, 1
        %s539 = scalar_select %p538, %s537, 1
        %s540 = smul.addr %s539, 4
        %s541 = scalar_lea.vmem %s0, %s540
        %p542 = pneg %p58
        %p543 = pneg %p55
        %s544 = sand.u32 %s73, 1
        %s545 = sand.u32 %s73, 1
        %s546 = smul.addr %s545, 8
        %s547 = scalar_lea.vmem [#allocation2], %s546
        %p548 = pneg %p86
        %p549 = pneg %p83
        %s550 = smul.u32 2, %s29
        %p551 = scmp.lt.s32.totalorder %s550, 1
        %s552 = scalar_select %p551, %s550, 1
        %s553 = smul.addr %s552, 4
        %s554 = scalar_lea.vmem %s2, %s553
        %p555 = pneg %p112
        %p556 = pneg %p109
        %s557 = smul.u32 2, %s29
        %p558 = scmp.lt.s32.totalorder %s557, 1
        %s559 = scalar_select %p558, %s557, 1
        %s560 = smul.addr %s559, 4
        %s561 = scalar_lea.vmem %s3, %s560
        %p562 = pneg %p138
        %p563 = pneg %p135
        %p564 = scmp.lt.s32.totalorder %s30, 2
        %s565 = scalar_select %p564, %s30, 2
        %s566 = scalar_lea.vmem %s4, %s565
        %p567 = pneg %p164
        %p568 = pneg %p161
        %p569 = pneg %p185
        %p570 = pneg %p182
        %p571 = pneg %p206
        %p572 = pneg %p203
        %p573 = pneg %p227
        %p574 = pneg %p224
        %p575 = pneg %p248
        %p576 = pneg %p245
        %p577 = scmp.lt.s32.totalorder %s30, 2
        %s578 = scalar_select %p577, %s30, 2
        %s579 = scalar_lea.vmem %s9, %s578
        %p580 = pneg %p274
        %p581 = pneg %p271
        %p582 = pneg %p295
        %p583 = pneg %p292
        %p584 = pneg %p316
        %p585 = pneg %p313
        %p586 = pneg %p337
        %p587 = pneg %p334
        %p588 = pneg %p358
        %p589 = pneg %p355
        %p590 = pneg %p386
        %p591 = pneg %p383
        %s592 = sand.u32 %s373, 1
        %s593 = sand.u32 %s373, 1
        %s594 = smul.addr %s593, 16
        %s595 = scalar_lea.vmem [#allocation3], %s594
        %s596 = smul.u32 2, %s29
        %p597 = scmp.lt.s32.totalorder %s596, 1
        %s598 = scalar_select %p597, %s596, 1
        %s599 = smul.addr %s598, 4
        %s600 = scalar_lea.vmem %s0, %s599
        %s601 = smul.u32 2, %s29
        %s602 = smul.u32 2, %s29
        %s603 = smul.u32 2, %s29
        %p604 = scmp.lt.s32.totalorder %s603, 1
        %s605 = scalar_select %p604, %s603, 1
        %s606 = smul.addr %s605, 4
        %s607 = scalar_lea.vmem %s2, %s606
        %s608 = smul.u32 2, %s29
        %s609 = smul.u32 2, %s29
        %p610 = scmp.lt.s32.totalorder %s609, 1
        %s611 = scalar_select %p610, %s609, 1
        %s612 = smul.addr %s611, 4
        %s613 = scalar_lea.vmem %s3, %s612
        %s614 = smul.u32 2, %s29
        %p615 = scmp.lt.s32.totalorder %s30, 2
        %s616 = scalar_select %p615, %s30, 2
        %s617 = scalar_lea.vmem %s4, %s616
        %p618 = scmp.lt.s32.totalorder %s30, 2
        %s619 = scalar_select %p618, %s30, 2
        %s620 = scalar_lea.vmem %s9, %s619
        %s621 = smul.u32 2, %s29
        %v623 = vld [vmem:[%s607] sm:$0xf]
        %v624 = vld [vmem:[%s607 + $0x4] sm:$0xf]
        %v625 = vld [vmem:[%s617] sm:$0x1]
        %v626 = vpack.c.bf16 %v625, %v625
        %v628 = vpack.i.b16 %v626, %v626
        %v630 = vlaneseq
        %v631 = vshrl.u32 %v630, 7
        %v632 = vsub.s32 0, %v631
        %v633 = vrot.slane %v628, %v632
        %v635 = vunpack.c.l.b16 %v633
        %v636 = vpack.c.b16 %v635, %v635
        %v638 = vmul.bf16 %v623, %v636
        %v639 = vmul.bf16 %v624, %v636
        %v640 = vld [vmem:[%s600] sm:$0xf]
        %v641 = vld [vmem:[%s600 + $0x4] sm:$0xf]
        %v642 = vld [vmem:[%s5] sm:$0xf]
        %v643 = vld [vmem:[%s5 + $0x4] sm:$0xf]
        %v644 = vld [vmem:[%s5 + $0x8] sm:$0xf]
        %v645 = vld [vmem:[%s5 + $0xc] sm:$0xf]
        %v646 = vld [vmem:[%s5 + $0x10] sm:$0xf]
        %v647 = vld [vmem:[%s5 + $0x14] sm:$0xf]
        %v648 = vld [vmem:[%s5 + $0x18] sm:$0xf]
        %v649 = vld [vmem:[%s5 + $0x1c] sm:$0xf]
        %v650 = vld [vmem:[%s5 + $0x20] sm:$0xf]
        %v651 = vld [vmem:[%s5 + $0x24] sm:$0xf]
        %v652 = vld [vmem:[%s5 + $0x28] sm:$0xf]
        %v653 = vld [vmem:[%s5 + $0x2c] sm:$0xf]
        %v654 = vld [vmem:[%s5 + $0x30] sm:$0xf]
        %v655 = vld [vmem:[%s5 + $0x34] sm:$0xf]
        %v656 = vld [vmem:[%s5 + $0x38] sm:$0xf]
        %v657 = vld [vmem:[%s5 + $0x3c] sm:$0xf]
        %v658 = vld [vmem:[%s533] sm:$0xf]
        %v659 = vld [vmem:[%s533 + $0x4] sm:$0xf]
        %v660 = vld [vmem:[%s6] sm:$0xf]
        %v661 = vld [vmem:[%s6 + $0x4] sm:$0xf]
        %v662 = vld [vmem:[%s6 + $0x8] sm:$0xf]
        %v663 = vld [vmem:[%s6 + $0xc] sm:$0xf]
        %v664 = vld [vmem:[%s6 + $0x10] sm:$0xf]
        %v665 = vld [vmem:[%s6 + $0x14] sm:$0xf]
        %v666 = vld [vmem:[%s6 + $0x18] sm:$0xf]
        %v667 = vld [vmem:[%s6 + $0x1c] sm:$0xf]
        %v668 = vld [vmem:[%s6 + $0x20] sm:$0xf]
        %v669 = vld [vmem:[%s6 + $0x24] sm:$0xf]
        %v670 = vld [vmem:[%s6 + $0x28] sm:$0xf]
        %v671 = vld [vmem:[%s6 + $0x2c] sm:$0xf]
        %v672 = vld [vmem:[%s6 + $0x30] sm:$0xf]
        %v673 = vld [vmem:[%s6 + $0x34] sm:$0xf]
        %v674 = vld [vmem:[%s6 + $0x38] sm:$0xf]
        %v675 = vld [vmem:[%s6 + $0x3c] sm:$0xf]
        %v678 = vunpack.c.l.b16 %v658
        %v679 = vunpack.c.l.b16 %v659
        %v680 = vpack.c.b16 %v679, %v678
        %v698 = vunpack.c.l.b16 %v660
        %v699 = vunpack.c.l.b16 %v661
        %v700 = vunpack.c.l.b16 %v662
        %v701 = vunpack.c.l.b16 %v663
        %v702 = vunpack.c.l.b16 %v664
        %v703 = vunpack.c.l.b16 %v665
        %v704 = vunpack.c.l.b16 %v666
        %v705 = vunpack.c.l.b16 %v667
        %v706 = vunpack.c.l.b16 %v668
        %v707 = vunpack.c.l.b16 %v669
        %v708 = vunpack.c.l.b16 %v670
        %v709 = vunpack.c.l.b16 %v671
        %v710 = vunpack.c.l.b16 %v672
        %v711 = vunpack.c.l.b16 %v673
        %v712 = vunpack.c.l.b16 %v674
        %v713 = vunpack.c.l.b16 %v675
        %v714 = vpack.c.b16 %v699, %v698
        %v715 = vpack.c.b16 %v701, %v700
        %v716 = vpack.c.b16 %v703, %v702
        %v717 = vpack.c.b16 %v705, %v704
        %v718 = vpack.c.b16 %v707, %v706
        %v719 = vpack.c.b16 %v709, %v708
        %v720 = vpack.c.b16 %v711, %v710
        %v721 = vpack.c.b16 %v713, %v712
        %730 = vmatprep.subr.bf16.mxu0 0
        %731 = vmatpush1.bf16.msra.mxu0 %v714
        %732 = vmatprep.subr.bf16.mxu0 0
        %733 = vmatpush1.bf16.msra.mxu0 %v715
        %734 = vmatprep.subr.bf16.mxu0 0
        %735 = vmatpush1.bf16.msra.mxu0 %v716
        %736 = vmatprep.subr.bf16.mxu0 0
        %737 = vmatpush1.bf16.msra.mxu0 %v717
        %738 = vmatprep.subr.bf16.mxu0 0
        %739 = vmatpush1.bf16.msra.mxu0 %v718
        %740 = vmatprep.subr.bf16.mxu0 0
        %741 = vmatpush1.bf16.msra.mxu0 %v719
        %742 = vmatprep.subr.bf16.mxu0 0
        %743 = vmatpush1.bf16.msra.mxu0 %v720
        %744 = vmatprep.subr.bf16.mxu0 0
        %745 = vmatpush1.bf16.msra.mxu0 %v721
        %746 = vmatprep.subr.bf16.mxu0 0
        %747 = vmatpush1.bf16.msra.mxu0 0
        %748 = vmatprep.subr.bf16.mxu0 0
        %749 = vmatpush1.bf16.msra.mxu0 0
        %750 = vmatprep.subr.bf16.mxu0 0
        %751 = vmatpush1.bf16.msra.mxu0 0
        %752 = vmatprep.subr.bf16.mxu0 0
        %753 = vmatpush1.bf16.msra.mxu0 0
        %754 = vmatprep.subr.bf16.mxu0 0
        %755 = vmatpush1.bf16.msra.mxu0 0
        %756 = vmatprep.subr.bf16.mxu0 0
        %757 = vmatpush1.bf16.msra.mxu0 0
        %758 = vmatprep.subr.bf16.mxu0 0
        %759 = vmatpush1.bf16.msra.mxu0 0
        %760 = vmatprep.subr.bf16.mxu0 0
        %761 = vmatpush1.bf16.msra.mxu0 0
        %762 = vmatprep.mubr.bf16.mxu0 0
        %763 = vmatmul.mubr.bf16.gmra.mrb[0].mxu0 %v680
        %v764 = vpop.f32.mrb[0].mxu0
        %v765 = vadd.f32 0.0, %v764
        %v766 = vpop.f32.mrb[0].mxu0
        %v767 = vpop.f32.mrb[0].mxu0
        %v768 = vadd.f32 0.0, %v767
        %v769 = vpop.f32.mrb[0].mxu0
        %770 = vdwg.mxu0
        %v773 = vunpack.c.l.b16 %v640
        %v774 = vunpack.c.l.b16 %v641
        %v775 = vpack.c.b16 %v774, %v773
        %v793 = vunpack.c.l.b16 %v642
        %v794 = vunpack.c.l.b16 %v643
        %v795 = vunpack.c.l.b16 %v644
        %v796 = vunpack.c.l.b16 %v645
        %v797 = vunpack.c.l.b16 %v646
        %v798 = vunpack.c.l.b16 %v647
        %v799 = vunpack.c.l.b16 %v648
        %v800 = vunpack.c.l.b16 %v649
        %v801 = vunpack.c.l.b16 %v650
        %v802 = vunpack.c.l.b16 %v651
        %v803 = vunpack.c.l.b16 %v652
        %v804 = vunpack.c.l.b16 %v653
        %v805 = vunpack.c.l.b16 %v654
        %v806 = vunpack.c.l.b16 %v655
        %v807 = vunpack.c.l.b16 %v656
        %v808 = vunpack.c.l.b16 %v657
        %v809 = vpack.c.b16 %v794, %v793
        %v810 = vpack.c.b16 %v796, %v795
        %v811 = vpack.c.b16 %v798, %v797
        %v812 = vpack.c.b16 %v800, %v799
        %v813 = vpack.c.b16 %v802, %v801
        %v814 = vpack.c.b16 %v804, %v803
        %v815 = vpack.c.b16 %v806, %v805
        %v816 = vpack.c.b16 %v808, %v807
        %825 = vmatprep.subr.bf16.mxu0 0
        %826 = vmatpush1.bf16.msra.mxu0 %v809
        %827 = vmatprep.subr.bf16.mxu0 0
        %828 = vmatpush1.bf16.msra.mxu0 %v810
        %829 = vmatprep.subr.bf16.mxu0 0
        %830 = vmatpush1.bf16.msra.mxu0 %v811
        %831 = vmatprep.subr.bf16.mxu0 0
        %832 = vmatpush1.bf16.msra.mxu0 %v812
        %833 = vmatprep.subr.bf16.mxu0 0
        %834 = vmatpush1.bf16.msra.mxu0 %v813
        %835 = vmatprep.subr.bf16.mxu0 0
        %836 = vmatpush1.bf16.msra.mxu0 %v814
        %837 = vmatprep.subr.bf16.mxu0 0
        %838 = vmatpush1.bf16.msra.mxu0 %v815
        %839 = vmatprep.subr.bf16.mxu0 0
        %840 = vmatpush1.bf16.msra.mxu0 %v816
        %841 = vmatprep.subr.bf16.mxu0 0
        %842 = vmatpush1.bf16.msra.mxu0 0
        %843 = vmatprep.subr.bf16.mxu0 0
        %844 = vmatpush1.bf16.msra.mxu0 0
        %845 = vmatprep.subr.bf16.mxu0 0
        %846 = vmatpush1.bf16.msra.mxu0 0
        %847 = vmatprep.subr.bf16.mxu0 0
        %848 = vmatpush1.bf16.msra.mxu0 0
        %849 = vmatprep.subr.bf16.mxu0 0
        %850 = vmatpush1.bf16.msra.mxu0 0
        %851 = vmatprep.subr.bf16.mxu0 0
        %852 = vmatpush1.bf16.msra.mxu0 0
        %853 = vmatprep.subr.bf16.mxu0 0
        %854 = vmatpush1.bf16.msra.mxu0 0
        %855 = vmatprep.subr.bf16.mxu0 0
        %856 = vmatpush1.bf16.msra.mxu0 0
        %857 = vmatprep.mubr.bf16.mxu0 0
        %858 = vmatmul.mubr.bf16.gmra.mrb[0].mxu0 %v775
        %v859 = vpop.f32.mrb[0].mxu0
        %v860 = vadd.f32 %v765, %v859
        %v861 = vpop.f32.mrb[0].mxu0
        %v862 = vpop.f32.mrb[0].mxu0
        %v863 = vadd.f32 %v768, %v862
        %v864 = vpop.f32.mrb[0].mxu0
        %865 = vdwg.mxu0
        %v866 = vld [vmem:[%s7] sm:$0xf]
        %v867 = vld [vmem:[%s7 + $0x4] sm:$0xf]
        %v868 = vld [vmem:[%s7 + $0x8] sm:$0xf]
        %v869 = vld [vmem:[%s7 + $0xc] sm:$0xf]
        %v870 = vld [vmem:[%s7 + $0x10] sm:$0xf]
        %v871 = vld [vmem:[%s7 + $0x14] sm:$0xf]
        %v872 = vld [vmem:[%s7 + $0x18] sm:$0xf]
        %v873 = vld [vmem:[%s7 + $0x1c] sm:$0xf]
        %v874 = vld [vmem:[%s7 + $0x20] sm:$0xf]
        %v875 = vld [vmem:[%s7 + $0x24] sm:$0xf]
        %v876 = vld [vmem:[%s7 + $0x28] sm:$0xf]
        %v877 = vld [vmem:[%s7 + $0x2c] sm:$0xf]
        %v878 = vld [vmem:[%s7 + $0x30] sm:$0xf]
        %v879 = vld [vmem:[%s7 + $0x34] sm:$0xf]
        %v880 = vld [vmem:[%s7 + $0x38] sm:$0xf]
        %v881 = vld [vmem:[%s7 + $0x3c] sm:$0xf]
        %v884 = vunpack.c.l.b16 %v638
        %v885 = vunpack.c.l.b16 %v639
        %v886 = vpack.c.b16 %v885, %v884
        %v904 = vunpack.c.l.b16 %v866
        %v905 = vunpack.c.l.b16 %v867
        %v906 = vunpack.c.l.b16 %v868
        %v907 = vunpack.c.l.b16 %v869
        %v908 = vunpack.c.l.b16 %v870
        %v909 = vunpack.c.l.b16 %v871
        %v910 = vunpack.c.l.b16 %v872
        %v911 = vunpack.c.l.b16 %v873
        %v912 = vunpack.c.l.b16 %v874
        %v913 = vunpack.c.l.b16 %v875
        %v914 = vunpack.c.l.b16 %v876
        %v915 = vunpack.c.l.b16 %v877
        %v916 = vunpack.c.l.b16 %v878
        %v917 = vunpack.c.l.b16 %v879
        %v918 = vunpack.c.l.b16 %v880
        %v919 = vunpack.c.l.b16 %v881
        %v920 = vpack.c.b16 %v905, %v904
        %v921 = vpack.c.b16 %v907, %v906
        %v922 = vpack.c.b16 %v909, %v908
        %v923 = vpack.c.b16 %v911, %v910
        %v924 = vpack.c.b16 %v913, %v912
        %v925 = vpack.c.b16 %v915, %v914
        %v926 = vpack.c.b16 %v917, %v916
        %v927 = vpack.c.b16 %v919, %v918
        %936 = vmatprep.subr.bf16.mxu0 0
        %937 = vmatpush1.bf16.msra.mxu0 %v920
        %938 = vmatprep.subr.bf16.mxu0 0
        %939 = vmatpush1.bf16.msra.mxu0 %v921
        %940 = vmatprep.subr.bf16.mxu0 0
        %941 = vmatpush1.bf16.msra.mxu0 %v922
        %942 = vmatprep.subr.bf16.mxu0 0
        %943 = vmatpush1.bf16.msra.mxu0 %v923
        %944 = vmatprep.subr.bf16.mxu0 0
        %945 = vmatpush1.bf16.msra.mxu0 %v924
        %946 = vmatprep.subr.bf16.mxu0 0
        %947 = vmatpush1.bf16.msra.mxu0 %v925
        %948 = vmatprep.subr.bf16.mxu0 0
        %949 = vmatpush1.bf16.msra.mxu0 %v926
        %950 = vmatprep.subr.bf16.mxu0 0
        %951 = vmatpush1.bf16.msra.mxu0 %v927
        %952 = vmatprep.subr.bf16.mxu0 0
        %953 = vmatpush1.bf16.msra.mxu0 0
        %954 = vmatprep.subr.bf16.mxu0 0
        %955 = vmatpush1.bf16.msra.mxu0 0
        %956 = vmatprep.subr.bf16.mxu0 0
        %957 = vmatpush1.bf16.msra.mxu0 0
        %958 = vmatprep.subr.bf16.mxu0 0
        %959 = vmatpush1.bf16.msra.mxu0 0
        %960 = vmatprep.subr.bf16.mxu0 0
        %961 = vmatpush1.bf16.msra.mxu0 0
        %962 = vmatprep.subr.bf16.mxu0 0
        %963 = vmatpush1.bf16.msra.mxu0 0
        %964 = vmatprep.subr.bf16.mxu0 0
        %965 = vmatpush1.bf16.msra.mxu0 0
        %966 = vmatprep.subr.bf16.mxu0 0
        %967 = vmatpush1.bf16.msra.mxu0 0
        %968 = vmatprep.mubr.bf16.mxu0 0
        %969 = vmatmul.mubr.bf16.gmra.mrb[0].mxu0 %v886
        %v970 = vpop.f32.mrb[0].mxu0
        %v971 = vadd.f32 0.0, %v970
        %v972 = vpop.f32.mrb[0].mxu0
        %v973 = vpop.f32.mrb[0].mxu0
        %v974 = vadd.f32 0.0, %v973
        %v975 = vpop.f32.mrb[0].mxu0
        %976 = vdwg.mxu0
        %v977 = vadd.f32 %v860, %v971
        %v978 = vadd.f32 %v863, %v974
        %v979 = vld [vmem:[%s613] sm:$0xf]
        %v980 = vld [vmem:[%s613 + $0x4] sm:$0xf]
        %v981 = vld [vmem:[%s8] sm:$0xf]
        %v982 = vld [vmem:[%s8 + $0x4] sm:$0xf]
        %v983 = vld [vmem:[%s8 + $0x8] sm:$0xf]
        %v984 = vld [vmem:[%s8 + $0xc] sm:$0xf]
        %v985 = vld [vmem:[%s8 + $0x10] sm:$0xf]
        %v986 = vld [vmem:[%s8 + $0x14] sm:$0xf]
        %v987 = vld [vmem:[%s8 + $0x18] sm:$0xf]
        %v988 = vld [vmem:[%s8 + $0x1c] sm:$0xf]
        %v989 = vld [vmem:[%s8 + $0x20] sm:$0xf]
        %v990 = vld [vmem:[%s8 + $0x24] sm:$0xf]
        %v991 = vld [vmem:[%s8 + $0x28] sm:$0xf]
        %v992 = vld [vmem:[%s8 + $0x2c] sm:$0xf]
        %v993 = vld [vmem:[%s8 + $0x30] sm:$0xf]
        %v994 = vld [vmem:[%s8 + $0x34] sm:$0xf]
        %v995 = vld [vmem:[%s8 + $0x38] sm:$0xf]
        %v996 = vld [vmem:[%s8 + $0x3c] sm:$0xf]
        %v999 = vunpack.c.l.b16 %v979
        %v1000 = vunpack.c.l.b16 %v980
        %v1001 = vpack.c.b16 %v1000, %v999
        %v1019 = vunpack.c.l.b16 %v981
        %v1020 = vunpack.c.l.b16 %v982
        %v1021 = vunpack.c.l.b16 %v983
        %v1022 = vunpack.c.l.b16 %v984
        %v1023 = vunpack.c.l.b16 %v985
        %v1024 = vunpack.c.l.b16 %v986
        %v1025 = vunpack.c.l.b16 %v987
        %v1026 = vunpack.c.l.b16 %v988
        %v1027 = vunpack.c.l.b16 %v989
        %v1028 = vunpack.c.l.b16 %v990
        %v1029 = vunpack.c.l.b16 %v991
        %v1030 = vunpack.c.l.b16 %v992
        %v1031 = vunpack.c.l.b16 %v993
        %v1032 = vunpack.c.l.b16 %v994
        %v1033 = vunpack.c.l.b16 %v995
        %v1034 = vunpack.c.l.b16 %v996
        %v1035 = vpack.c.b16 %v1020, %v1019
        %v1036 = vpack.c.b16 %v1022, %v1021
        %v1037 = vpack.c.b16 %v1024, %v1023
        %v1038 = vpack.c.b16 %v1026, %v1025
        %v1039 = vpack.c.b16 %v1028, %v1027
        %v1040 = vpack.c.b16 %v1030, %v1029
        %v1041 = vpack.c.b16 %v1032, %v1031
        %v1042 = vpack.c.b16 %v1034, %v1033
        %1051 = vmatprep.subr.bf16.mxu0 0
        %1052 = vmatpush1.bf16.msra.mxu0 %v1035
        %1053 = vmatprep.subr.bf16.mxu0 0
        %1054 = vmatpush1.bf16.msra.mxu0 %v1036
        %1055 = vmatprep.subr.bf16.mxu0 0
        %1056 = vmatpush1.bf16.msra.mxu0 %v1037
        %1057 = vmatprep.subr.bf16.mxu0 0
        %1058 = vmatpush1.bf16.msra.mxu0 %v1038
        %1059 = vmatprep.subr.bf16.mxu0 0
        %1060 = vmatpush1.bf16.msra.mxu0 %v1039
        %1061 = vmatprep.subr.bf16.mxu0 0
        %1062 = vmatpush1.bf16.msra.mxu0 %v1040
        %1063 = vmatprep.subr.bf16.mxu0 0
        %1064 = vmatpush1.bf16.msra.mxu0 %v1041
        %1065 = vmatprep.subr.bf16.mxu0 0
        %1066 = vmatpush1.bf16.msra.mxu0 %v1042
        %1067 = vmatprep.subr.bf16.mxu0 0
        %1068 = vmatpush1.bf16.msra.mxu0 0
        %1069 = vmatprep.subr.bf16.mxu0 0
        %1070 = vmatpush1.bf16.msra.mxu0 0
        %1071 = vmatprep.subr.bf16.mxu0 0
        %1072 = vmatpush1.bf16.msra.mxu0 0
        %1073 = vmatprep.subr.bf16.mxu0 0
        %1074 = vmatpush1.bf16.msra.mxu0 0
        %1075 = vmatprep.subr.bf16.mxu0 0
        %1076 = vmatpush1.bf16.msra.mxu0 0
        %1077 = vmatprep.subr.bf16.mxu0 0
        %1078 = vmatpush1.bf16.msra.mxu0 0
        %1079 = vmatprep.subr.bf16.mxu0 0
        %1080 = vmatpush1.bf16.msra.mxu0 0
        %1081 = vmatprep.subr.bf16.mxu0 0
        %1082 = vmatpush1.bf16.msra.mxu0 0
        %1083 = vmatprep.mubr.bf16.mxu0 0
        %1084 = vmatmul.mubr.bf16.gmra.mrb[0].mxu0 %v1001
        %v1085 = vpop.f32.mrb[0].mxu0
        %v1086 = vadd.f32 0.0, %v1085
        %v1087 = vpop.f32.mrb[0].mxu0
        %v1088 = vpop.f32.mrb[0].mxu0
        %v1089 = vadd.f32 0.0, %v1088
        %v1090 = vpop.f32.mrb[0].mxu0
        %1091 = vdwg.mxu0
        %v1092 = vadd.f32 %v977, %v1086
        %v1093 = vadd.f32 %v978, %v1089
        %v1094 = vld [vmem:[%s620] sm:$0x1]
        %v1096 = vlaneseq
        %v1097 = vshrl.u32 %v1096, 7
        %v1098 = vsub.s32 0, %v1097
        %v1099 = vrot.slane %v1094, %v1098
        %v1101 = vadd.f32 %v1092, %v1099
        %v1102 = vadd.f32 %v1093, %v1099
        %v1103 = vmax.f32 %v1101, 0.0
        %v1104 = vmax.f32 %v1102, 0.0
        %v1105 = vpack.c.bf16 %v1104, %v1103
        %v1106 = vld [vmem:[%s10] sm:$0xf]
        %v1107 = vld [vmem:[%s10 + $0x4] sm:$0xf]
        %v1108 = vld [vmem:[%s10 + $0x8] sm:$0xf]
        %v1109 = vld [vmem:[%s10 + $0xc] sm:$0xf]
        %v1110 = vld [vmem:[%s10 + $0x10] sm:$0xf]
        %v1111 = vld [vmem:[%s10 + $0x14] sm:$0xf]
        %v1112 = vld [vmem:[%s10 + $0x18] sm:$0xf]
        %v1113 = vld [vmem:[%s10 + $0x1c] sm:$0xf]
        %v1114 = vld [vmem:[%s10 + $0x20] sm:$0xf]
        %v1115 = vld [vmem:[%s10 + $0x24] sm:$0xf]
        %v1116 = vld [vmem:[%s10 + $0x28] sm:$0xf]
        %v1117 = vld [vmem:[%s10 + $0x2c] sm:$0xf]
        %v1118 = vld [vmem:[%s10 + $0x30] sm:$0xf]
        %v1119 = vld [vmem:[%s10 + $0x34] sm:$0xf]
        %v1120 = vld [vmem:[%s10 + $0x38] sm:$0xf]
        %v1121 = vld [vmem:[%s10 + $0x3c] sm:$0xf]
        %v1122 = vld [vmem:[%s11] sm:$0x1]
        %v1124 = vlaneseq
        %v1125 = vshrl.u32 %v1124, 7
        %v1126 = vsub.s32 0, %v1125
        %v1127 = vrot.slane %v1122, %v1126
        %v1145 = vunpack.c.l.b16 %v1106
        %v1146 = vunpack.c.l.b16 %v1107
        %v1147 = vunpack.c.l.b16 %v1108
        %v1148 = vunpack.c.l.b16 %v1109
        %v1149 = vunpack.c.l.b16 %v1110
        %v1150 = vunpack.c.l.b16 %v1111
        %v1151 = vunpack.c.l.b16 %v1112
        %v1152 = vunpack.c.l.b16 %v1113
        %v1153 = vunpack.c.l.b16 %v1114
        %v1154 = vunpack.c.l.b16 %v1115
        %v1155 = vunpack.c.l.b16 %v1116
        %v1156 = vunpack.c.l.b16 %v1117
        %v1157 = vunpack.c.l.b16 %v1118
        %v1158 = vunpack.c.l.b16 %v1119
        %v1159 = vunpack.c.l.b16 %v1120
        %v1160 = vunpack.c.l.b16 %v1121
        %v1161 = vpack.c.b16 %v1146, %v1145
        %v1162 = vpack.c.b16 %v1148, %v1147
        %v1163 = vpack.c.b16 %v1150, %v1149
        %v1164 = vpack.c.b16 %v1152, %v1151
        %v1165 = vpack.c.b16 %v1154, %v1153
        %v1166 = vpack.c.b16 %v1156, %v1155
        %v1167 = vpack.c.b16 %v1158, %v1157
        %v1168 = vpack.c.b16 %v1160, %v1159
        %1177 = vmatprep.subr.bf16.mxu0 0
        %1178 = vmatpush1.bf16.msra.mxu0 %v1161
        %1179 = vmatprep.subr.bf16.mxu0 0
        %1180 = vmatpush1.bf16.msra.mxu0 %v1162
        %1181 = vmatprep.subr.bf16.mxu0 0
        %1182 = vmatpush1.bf16.msra.mxu0 %v1163
        %1183 = vmatprep.subr.bf16.mxu0 0
        %1184 = vmatpush1.bf16.msra.mxu0 %v1164
        %1185 = vmatprep.subr.bf16.mxu0 0
        %1186 = vmatpush1.bf16.msra.mxu0 %v1165
        %1187 = vmatprep.subr.bf16.mxu0 0
        %1188 = vmatpush1.bf16.msra.mxu0 %v1166
        %1189 = vmatprep.subr.bf16.mxu0 0
        %1190 = vmatpush1.bf16.msra.mxu0 %v1167
        %1191 = vmatprep.subr.bf16.mxu0 0
        %1192 = vmatpush1.bf16.msra.mxu0 %v1168
        %1193 = vmatprep.subr.bf16.mxu0 0
        %1194 = vmatpush1.bf16.msra.mxu0 0
        %1195 = vmatprep.subr.bf16.mxu0 0
        %1196 = vmatpush1.bf16.msra.mxu0 0
        %1197 = vmatprep.subr.bf16.mxu0 0
        %1198 = vmatpush1.bf16.msra.mxu0 0
        %1199 = vmatprep.subr.bf16.mxu0 0
        %1200 = vmatpush1.bf16.msra.mxu0 0
        %1201 = vmatprep.subr.bf16.mxu0 0
        %1202 = vmatpush1.bf16.msra.mxu0 0
        %1203 = vmatprep.subr.bf16.mxu0 0
        %1204 = vmatpush1.bf16.msra.mxu0 0
        %1205 = vmatprep.subr.bf16.mxu0 0
        %1206 = vmatpush1.bf16.msra.mxu0 0
        %1207 = vmatprep.subr.bf16.mxu0 0
        %1208 = vmatpush1.bf16.msra.mxu0 0
        %1209 = vmatprep.mubr.bf16.mxu0 0
        %1210 = vmatmul.mubr.bf16.gmra.mrb[0].mxu0 %v1105
        %v1211 = vpop.f32.mrb[0].mxu0
        %v1212 = vadd.f32 %v1127, %v1211
        %v1213 = vpop.f32.mrb[0].mxu0
        %v1214 = vpop.f32.mrb[0].mxu0
        %v1215 = vadd.f32 %v1127, %v1214
        %v1216 = vpop.f32.mrb[0].mxu0
        %1217 = vdwg.mxu0
        %v1218 = vmax.f32 %v1212, 0.0
        %v1219 = vmax.f32 %v1215, 0.0
        %v1220 = vpack.c.bf16 %v1219, %v1218
        %v1221 = vld [vmem:[%s12] sm:$0xf]
        %v1222 = vld [vmem:[%s12 + $0x4] sm:$0xf]
        %v1223 = vld [vmem:[%s12 + $0x8] sm:$0xf]
        %v1224 = vld [vmem:[%s12 + $0xc] sm:$0xf]
        %v1225 = vld [vmem:[%s12 + $0x10] sm:$0xf]
        %v1226 = vld [vmem:[%s12 + $0x14] sm:$0xf]
        %v1227 = vld [vmem:[%s12 + $0x18] sm:$0xf]
        %v1228 = vld [vmem:[%s12 + $0x1c] sm:$0xf]
        %v1229 = vld [vmem:[%s12 + $0x20] sm:$0xf]
        %v1230 = vld [vmem:[%s12 + $0x24] sm:$0xf]
        %v1231 = vld [vmem:[%s12 + $0x28] sm:$0xf]
        %v1232 = vld [vmem:[%s12 + $0x2c] sm:$0xf]
        %v1233 = vld [vmem:[%s12 + $0x30] sm:$0xf]
        %v1234 = vld [vmem:[%s12 + $0x34] sm:$0xf]
        %v1235 = vld [vmem:[%s12 + $0x38] sm:$0xf]
        %v1236 = vld [vmem:[%s12 + $0x3c] sm:$0xf]
        %v1237 = vld [vmem:[%s13] sm:$0x1]
        %v1239 = vlaneseq
        %v1240 = vshrl.u32 %v1239, 7
        %v1241 = vsub.s32 0, %v1240
        %v1242 = vrot.slane %v1237, %v1241
        %v1260 = vunpack.c.l.b16 %v1221
        %v1261 = vunpack.c.l.b16 %v1222
        %v1262 = vunpack.c.l.b16 %v1223
        %v1263 = vunpack.c.l.b16 %v1224
        %v1264 = vunpack.c.l.b16 %v1225
        %v1265 = vunpack.c.l.b16 %v1226
        %v1266 = vunpack.c.l.b16 %v1227
        %v1267 = vunpack.c.l.b16 %v1228
        %v1268 = vunpack.c.l.b16 %v1229
        %v1269 = vunpack.c.l.b16 %v1230
        %v1270 = vunpack.c.l.b16 %v1231
        %v1271 = vunpack.c.l.b16 %v1232
        %v1272 = vunpack.c.l.b16 %v1233
        %v1273 = vunpack.c.l.b16 %v1234
        %v1274 = vunpack.c.l.b16 %v1235
        %v1275 = vunpack.c.l.b16 %v1236
        %v1276 = vpack.c.b16 %v1261, %v1260
        %v1277 = vpack.c.b16 %v1263, %v1262
        %v1278 = vpack.c.b16 %v1265, %v1264
        %v1279 = vpack.c.b16 %v1267, %v1266
        %v1280 = vpack.c.b16 %v1269, %v1268
        %v1281 = vpack.c.b16 %v1271, %v1270
        %v1282 = vpack.c.b16 %v1273, %v1272
        %v1283 = vpack.c.b16 %v1275, %v1274
        %1292 = vmatprep.subr.bf16.mxu0 0
        %1293 = vmatpush1.bf16.msra.mxu0 %v1276
        %1294 = vmatprep.subr.bf16.mxu0 0
        %1295 = vmatpush1.bf16.msra.mxu0 %v1277
        %1296 = vmatprep.subr.bf16.mxu0 0
        %1297 = vmatpush1.bf16.msra.mxu0 %v1278
        %1298 = vmatprep.subr.bf16.mxu0 0
        %1299 = vmatpush1.bf16.msra.mxu0 %v1279
        %1300 = vmatprep.subr.bf16.mxu0 0
        %1301 = vmatpush1.bf16.msra.mxu0 %v1280
        %1302 = vmatprep.subr.bf16.mxu0 0
        %1303 = vmatpush1.bf16.msra.mxu0 %v1281
        %1304 = vmatprep.subr.bf16.mxu0 0
        %1305 = vmatpush1.bf16.msra.mxu0 %v1282
        %1306 = vmatprep.subr.bf16.mxu0 0
        %1307 = vmatpush1.bf16.msra.mxu0 %v1283
        %1308 = vmatprep.subr.bf16.mxu0 0
        %1309 = vmatpush1.bf16.msra.mxu0 0
        %1310 = vmatprep.subr.bf16.mxu0 0
        %1311 = vmatpush1.bf16.msra.mxu0 0
        %1312 = vmatprep.subr.bf16.mxu0 0
        %1313 = vmatpush1.bf16.msra.mxu0 0
        %1314 = vmatprep.subr.bf16.mxu0 0
        %1315 = vmatpush1.bf16.msra.mxu0 0
        %1316 = vmatprep.subr.bf16.mxu0 0
        %1317 = vmatpush1.bf16.msra.mxu0 0
        %1318 = vmatprep.subr.bf16.mxu0 0
        %1319 = vmatpush1.bf16.msra.mxu0 0
        %1320 = vmatprep.subr.bf16.mxu0 0
        %1321 = vmatpush1.bf16.msra.mxu0 0
        %1322 = vmatprep.subr.bf16.mxu0 0
        %1323 = vmatpush1.bf16.msra.mxu0 0
        %1324 = vmatprep.mubr.bf16.mxu0 0
        %1325 = vmatmul.mubr.bf16.gmra.mrb[0].mxu0 %v1220
        %v1326 = vpop.f32.mrb[0].mxu0
        %v1327 = vadd.f32 %v1242, %v1326
        %v1328 = vpop.f32.mrb[0].mxu0
        %v1329 = vpop.f32.mrb[0].mxu0
        %v1330 = vadd.f32 %v1242, %v1329
        %v1331 = vpop.f32.mrb[0].mxu0
        %1332 = vdwg.mxu0
        %1333 = vst [vmem:[%s595] sm:$0xff] %v1327
        %1334 = vst [vmem:[%s595 + $0x8] sm:$0xff] %v1330
        %s1335 = sand.u32 %s373, 1
        %s1336 = sand.u32 %s373, 1
        %s1337 = smul.addr %s1336, 16
        %s1338 = scalar_lea.vmem [#allocation3], %s1337
        // Predicated region
        $region118: #{coma_critic_forward.1} parent=112 // pred_check
          %p1339 = pneg %p383
        $region119: #{coma_critic_forward.1} parent=112 // pred_check_branch
          %1341 = sbr.rel (%p1339) target = $region121
        $region120: #{coma_critic_forward.1} parent=112 // pred_region
          %s1342 = smul.u32 2, %s29
          %s1343 = smul.addr %s1342, 3
          %s1344 = sadd.s32 %s30, %s1343
          %s1345 = smul.addr %s1344, 8
          %s1346 = scalar_lea.vmem %s14, %s1345
          // Predicated region
          $region122: #{coma_critic_forward.1} parent=120 // pred_check
            _
          $region123: #{coma_critic_forward.1} parent=120 // pred_check_branch
            %1348 = sbr.rel (0) target = $region125
          $region124: #{coma_critic_forward.1} parent=120 // pred_region
            // Predicated region
            $region126: #{coma_critic_forward.1} parent=124 // pred_check
              _
            $region127: #{coma_critic_forward.1} parent=124 // pred_check_branch
              %1350 = sbr.rel (0) target = $region129
            $region128: #{coma_critic_forward.1} parent=124 // pred_region
              // Predicated region
              $region141: #{coma_critic_forward.1} parent=128 // pred_check
                _
              $region142: #{coma_critic_forward.1} parent=128 // pred_check_branch
                %1367 = sbr.rel (0) target = $region144
              $region143: #{coma_critic_forward.1} parent=128 // pred_region
                loop: start=0, step=1, limit=1
                $region145: #{coma_critic_forward.1} parent=143 // loop_pre_header
                  _
                $region146: #{coma_critic_forward.1} parent=143 // loop_header
                  %s1369 = sphi 0, %s1373
                  %p1370 = scmp.ge.s32.totalorder %s1369, 1
                  %s1374 = sphi %s1338, %s1338
                  %s1375 = sphi %s1346, %s1346
                $region147: #{coma_critic_forward.1} parent=143 // loop_header_branch
                  %1372 = sbr.rel (%p1370) target = $region151
                $region148: #{coma_critic_forward.1} parent=143 // loop_body
                  %v1376 = vld [vmem:[%s1374] sm:$0xff]
                  %1377 = vst [vmem:[%s1375] sm:$0xff] %v1376
                  %v1378 = vld [vmem:[%s1374 + $0x8] sm:$0xff]
                  %1379 = vst [vmem:[%s1375 + $0x18] sm:$0xff] %v1378
                $region149: #{coma_critic_forward.1} parent=143 // loop_footer
                  %s1373 = sadd.s32 1, %s1369
                $region150: #{coma_critic_forward.1} parent=143 // loop_footer_branch
                  %1368 = sbr.rel target = $region146
                $region151: #{coma_critic_forward.1} parent=143 // loop_exit
                  _
              $region144: #{coma_critic_forward.1} parent=128 // pred_fallthru
                _
              // Predicated region
              $region152: #{coma_critic_forward.1} parent=128 // pred_check
                _
              $region153: #{coma_critic_forward.1} parent=128 // pred_check_branch
                %1381 = sbr.rel target = $region155
              $region154: #{coma_critic_forward.1} parent=128 // pred_region
                _
              $region155: #{coma_critic_forward.1} parent=128 // pred_fallthru
                _
            $region129: #{coma_critic_forward.1} parent=124 // pred_fallthru
              _
            // Predicated region
            $region130: #{coma_critic_forward.1} parent=124 // pred_check
              _
            $region131: #{coma_critic_forward.1} parent=124 // pred_check_branch
              %1352 = sbr.rel target = $region133
            $region132: #{coma_critic_forward.1} parent=124 // pred_region
              loop: start=0, step=1, limit=1
              $region134: #{coma_critic_forward.1} parent=132 // loop_pre_header
                _
              $region135: #{coma_critic_forward.1} parent=132 // loop_header
                %s1355 = sphi 0, %s1359
                %p1356 = scmp.ge.s32.totalorder %s1355, 1
                %s1360 = sphi %s1338, %s1338
                %s1361 = sphi %s1346, %s1346
              $region136: #{coma_critic_forward.1} parent=132 // loop_header_branch
                %1358 = sbr.rel (%p1356) target = $region140
              $region137: #{coma_critic_forward.1} parent=132 // loop_body
                %v1362 = vld [vmem:[%s1360] sm:$0xff]
                %1363 = vst [vmem:[%s1361] sm:$0xff] %v1362
                %v1364 = vld [vmem:[%s1360 + $0x8] sm:$0xff]
                %1365 = vst [vmem:[%s1361 + $0x18] sm:$0xff] %v1364
              $region138: #{coma_critic_forward.1} parent=132 // loop_footer
                %s1359 = sadd.s32 1, %s1355
              $region139: #{coma_critic_forward.1} parent=132 // loop_footer_branch
                %1354 = sbr.rel target = $region135
              $region140: #{coma_critic_forward.1} parent=132 // loop_exit
                _
            $region133: #{coma_critic_forward.1} parent=124 // pred_fallthru
              _
          $region125: #{coma_critic_forward.1} parent=120 // pred_fallthru
            _
          %1382 = vnop
        $region121: #{coma_critic_forward.1} parent=112 // pred_fallthru
          _
      $region113: #{coma_critic_forward.1} parent=5 // pred_fallthru
        _
      %p1383 = scmp.le.s32.totalorder 2, %s20
      // Predicated region
      $region156: #{coma_critic_forward.1} parent=5 // pred_check
        %p1384 = pneg %p1383
      $region157: #{coma_critic_forward.1} parent=5 // pred_check_branch
        %1386 = sbr.rel (%p1384) target = $region159
      $region158: #{coma_critic_forward.1} parent=5 // pred_region
        %s1387 = ssub.s32 %s20, 2
        // Predicated region
        $region160: #{coma_critic_forward.1} parent=158 // pred_check
          %p1388 = pneg %p389
        $region161: #{coma_critic_forward.1} parent=158 // pred_check_branch
          %1390 = sbr.rel (%p1388) target = $region163
        $region162: #{coma_critic_forward.1} parent=158 // pred_region
          %s1391 = sand.u32 %s374, 1
          %s1392 = sand.u32 %s374, 1
          %s1393 = smul.addr %s1392, 16
          %s1394 = scalar_lea.vmem [#allocation3], %s1393
        $region163: #{coma_critic_forward.1} parent=158 // pred_fallthru
          _
      $region159: #{coma_critic_forward.1} parent=5 // pred_fallthru
        _
    $region6: #{coma_critic_forward.1} parent=1 // loop_footer
      %s24 = sadd.s32 1, %s20
    $region7: #{coma_critic_forward.1} parent=1 // loop_footer_branch
      %19 = sbr.rel target = $region3
    $region8: #{coma_critic_forward.1} parent=1 // loop_exit
      _

</llo_original>
